<compile_context>
chip_gen: v7x
topology: tpu7x:2x2x1
jax: 0.10.0
libtpu: 0.0.40
codegen_flags: <defaults>
</compile_context>

<pallas_src>
import jax
import jax.numpy as jnp
from jax.experimental import pallas as pl
from jax.experimental.pallas import tpu as pltpu
import numpy as np

_LANES = 128      # vreg lane width (f32)
_SUBLANES = 8     # vreg sublane count (f32)


def fourier_regressor_kernel(x_ref, freq_ref, shift_ref, w_ref, b_ref, o_ref):
    # x_ref:     (tile_n, K)           batch rows on sublanes, input dim on lanes
    # freq_ref:  (K, H)                == freq.T from the torch module (replicated)
    # shift_ref: (1, H)                broadcast over rows
    # w_ref:     (H, T_pad)            == W_out.T zero-padded on lanes to a multiple of 128
    # b_ref:     (1, T_pad)            bias, zero-padded to match
    # o_ref:     (tile_n, T_pad)       lane-dense output block (sliced to T in the wrapper)
    z = jnp.dot(x_ref[...], freq_ref[...], preferred_element_type=jnp.float32)
    feat = jnp.sin(z + shift_ref[...])            # random Fourier features (VPU-bound at scale)
    out = jnp.dot(feat, w_ref[...], preferred_element_type=jnp.float32) + b_ref[...]
    o_ref[...] = out.astype(o_ref.dtype)


def _round_up(v, m):
    return ((v + m - 1) // m) * m


def fourier_regressor_forward(x, freq_t, shift, w_t, b, *, tile_n=None):
    """x: (N, K) f32; freq_t: (K, H); shift: (H,); w_t: (H, T); b: (T,) -> (N, T) f32."""
    N, K = x.shape
    Kf, H = freq_t.shape
    Hw, T = w_t.shape
    assert K == Kf and H == Hw

    # --- tile selection: big tiles amortize the ~0.35 us/step fixed cost, but
    #     keep >=2 parallel grid steps when the batch permits so v7x megacore
    #     (2 TensorCores) shards the batch axis across both cores. ---
    if tile_n is None:
        if N >= 2048:
            tile_n = 1024
        elif N >= 2 * _SUBLANES:
            tile_n = _round_up(pl.cdiv(N, 2), _SUBLANES)   # exactly 2 steps
        else:
            tile_n = _round_up(max(N, 1), _SUBLANES)       # single tiny step
    grid_n = pl.cdiv(N, tile_n)
    n_pad = grid_n * tile_n

    # --- lane-dense output: pad the target dim to a multiple of 128 lanes so
    #     stores are full-width vst (the MXU pads the N dimension internally
    #     anyway; the extra columns are essentially free FLOPs). ---
    t_pad = _round_up(T, _LANES)

    x_p = x.astype(jnp.float32)
    if n_pad != N:
        x_p = jnp.pad(x_p, ((0, n_pad - N), (0, 0)))       # ragged last tile -> zero rows
    freq_p = freq_t.astype(jnp.float32)
    shift2 = shift.reshape(1, H).astype(jnp.float32)
    w_p = jnp.pad(w_t.astype(jnp.float32), ((0, 0), (0, t_pad - T)))
    b_p = jnp.pad(b.reshape(1, T).astype(jnp.float32), ((0, 0), (0, t_pad - T)))

    # Advisory cost estimate for the XLA scheduler.
    flops = 2.0 * n_pad * K * H + 2.0 * n_pad * H * t_pad + n_pad * H
    bytes_accessed = 4 * (n_pad * K + K * H + H + H * t_pad + t_pad + n_pad * t_pad)
    cost = pl.CostEstimate(
        flops=int(flops),
        transcendentals=int(n_pad * H),        # sin() per feature element
        bytes_accessed=int(bytes_accessed),
    )

    out_padded = pl.pallas_call(
        fourier_regressor_kernel,
        out_shape=jax.ShapeDtypeStruct((n_pad, t_pad), jnp.float32),
        grid_spec=pltpu.PrefetchScalarGridSpec(
            num_scalar_prefetch=0,
            grid=(grid_n,),
            in_specs=[
                pl.BlockSpec((tile_n, K), lambda i: (i, 0)),   # x: tiled over batch rows
                pl.BlockSpec((K, H),      lambda i: (0, 0)),   # freq.T: replicated
                pl.BlockSpec((1, H),      lambda i: (0, 0)),   # shift: replicated
                pl.BlockSpec((H, t_pad),  lambda i: (0, 0)),   # W.T (lane-padded): replicated
                pl.BlockSpec((1, t_pad),  lambda i: (0, 0)),   # bias (lane-padded): replicated
            ],
            out_specs=pl.BlockSpec((tile_n, t_pad), lambda i: (i, 0)),
        ),
        compiler_params=pltpu.CompilerParams(
            dimension_semantics=("parallel",),
        ),
        cost_estimate=cost,
    )(x_p, freq_p, shift2, w_p, b_p)

    # Slice off batch padding rows and the lane padding of the target dim.
    return out_padded[:N, :T]


def forward_reference(x, freq_t, shift, w_t, b):
    feat = jnp.sin(x @ freq_t + shift)
    return feat @ w_t + b


if __name__ == "__main__":
    # sizes = [input_size, hidden_size, target_size]
    input_size, hidden_size, target_size = 8, 128, 8
    batch = 200   # deliberately NOT a multiple of the tile to exercise ragged handling
    bandwidth = np.full((input_size,), 2.0, dtype=np.float32)

    key = jax.random.PRNGKey(0)
    k_x, k_f, k_s, k_w, k_b = jax.random.split(key, 5)

    # Deterministic parameter init (matching shapes from the module __init__):
    #   freq  ~ N(0, diag(1/bandwidth)),  shape (hidden, input)  -> stored transposed (input, hidden)
    #   shift ~ U(-pi, pi),               shape (hidden,)
    #   W_out ~ U(-1/sqrt(H), 1/sqrt(H)), shape (target, hidden) -> stored transposed (hidden, target)
    #   b_out ~ U(-1/sqrt(H), 1/sqrt(H)), shape (target,)
    std = jnp.sqrt(1.0 / jnp.asarray(bandwidth))              # (input,)
    freq = jax.random.normal(k_f, (hidden_size, input_size), jnp.float32) * std[None, :]
    freq_t = freq.T                                           # (input, hidden)
    shift = jax.random.uniform(k_s, (hidden_size,), jnp.float32,
                               minval=-jnp.pi, maxval=jnp.pi)
    bound = 1.0 / jnp.sqrt(jnp.float32(hidden_size))
    w_out = jax.random.uniform(k_w, (target_size, hidden_size), jnp.float32,
                               minval=-bound, maxval=bound)
    w_t = w_out.T                                             # (hidden, target)
    b_out = jax.random.uniform(k_b, (target_size,), jnp.float32,
                               minval=-bound, maxval=bound)

    x = jax.random.normal(k_x, (batch, input_size), jnp.float32)

    out = fourier_regressor_forward(x, freq_t, shift, w_t, b_out)
    out = jax.block_until_ready(out)

    ref = forward_reference(x, freq_t, shift, w_t, b_out)
    assert out.shape == (batch, target_size)
    np.testing.assert_allclose(np.asarray(out), np.asarray(ref), rtol=1e-5, atol=1e-5)

    print("KERNEL_OK")
</pallas_src>

<mosaic_0001>
module attributes {stable_mosaic.version = 11 : i64} {
  func.func @fourier_regressor_kernel(%arg0: i32, %arg1: memref<104x8xf32, #tpu.memory_space<vmem>>, %arg2: memref<8x128xf32, #tpu.memory_space<vmem>>, %arg3: memref<1x128xf32, #tpu.memory_space<vmem>>, %arg4: memref<128x128xf32, #tpu.memory_space<vmem>>, %arg5: memref<1x128xf32, #tpu.memory_space<vmem>>, %arg6: memref<104x128xf32, #tpu.memory_space<vmem>>) attributes {dimension_semantics = [#tpu.dimension_semantics<parallel>], iteration_bounds = array<i64: 2>, scalar_prefetch = 0 : i64, scratch_operands = 0 : i64, tpu.core_type = #tpu.core_type<tc>, window_params = [{transform_indices = @transform_0, window_bounds = array<i64: 104, 8>}, {pipeline_mode = #tpu.pipeline_mode<synchronous>, transform_indices = @transform_1, window_bounds = array<i64: 8, 128>}, {pipeline_mode = #tpu.pipeline_mode<synchronous>, transform_indices = @transform_2, window_bounds = array<i64: 1, 128>}, {pipeline_mode = #tpu.pipeline_mode<synchronous>, transform_indices = @transform_3, window_bounds = array<i64: 128, 128>}, {pipeline_mode = #tpu.pipeline_mode<synchronous>, transform_indices = @transform_4, window_bounds = array<i64: 1, 128>}, {transform_indices = @transform_5, window_bounds = array<i64: 104, 128>}]} {
    %c0 = arith.constant 0 : index
    %c0_0 = arith.constant 0 : index
    %0 = vector.load %arg1[%c0, %c0_0] : memref<104x8xf32, #tpu.memory_space<vmem>>, vector<104x8xf32>
    %c0_1 = arith.constant 0 : index
    %c0_2 = arith.constant 0 : index
    %1 = vector.load %arg2[%c0_1, %c0_2] : memref<8x128xf32, #tpu.memory_space<vmem>>, vector<8x128xf32>
    %cst = arith.constant dense<0.000000e+00> : vector<104x128xf32>
    %2 = tpu.matmul %0, %1, %cst {dimension_numbers = #tpu.dot_dimension_numbers<[1], [0], [0], [1], [0, 0, 1, 1], [], []>} : vector<104x8xf32>, vector<8x128xf32>, vector<104x128xf32> -> vector<104x128xf32>
    %c0_3 = arith.constant 0 : index
    %c0_4 = arith.constant 0 : index
    %3 = vector.load %arg3[%c0_3, %c0_4] : memref<1x128xf32, #tpu.memory_space<vmem>>, vector<1x128xf32>
    %4 = vector.broadcast %3 : vector<1x128xf32> to vector<104x128xf32>
    %5 = arith.addf %2, %4 : vector<104x128xf32>
    %6 = math.sin %5 : vector<104x128xf32>
    %c0_5 = arith.constant 0 : index
    %c0_6 = arith.constant 0 : index
    %7 = vector.load %arg4[%c0_5, %c0_6] : memref<128x128xf32, #tpu.memory_space<vmem>>, vector<128x128xf32>
    %cst_7 = arith.constant dense<0.000000e+00> : vector<104x128xf32>
    %8 = tpu.matmul %6, %7, %cst_7 {dimension_numbers = #tpu.dot_dimension_numbers<[1], [0], [0], [1], [0, 0, 1, 1], [], []>} : vector<104x128xf32>, vector<128x128xf32>, vector<104x128xf32> -> vector<104x128xf32>
    %c0_8 = arith.constant 0 : index
    %c0_9 = arith.constant 0 : index
    %9 = vector.load %arg5[%c0_8, %c0_9] : memref<1x128xf32, #tpu.memory_space<vmem>>, vector<1x128xf32>
    %10 = vector.broadcast %9 : vector<1x128xf32> to vector<104x128xf32>
    %11 = arith.addf %8, %10 : vector<104x128xf32>
    %c0_10 = arith.constant 0 : index
    %c0_11 = arith.constant 0 : index
    %12 = vector.load %arg6[%c0_10, %c0_11] : memref<104x128xf32, #tpu.memory_space<vmem>>, vector<104x128xf32>
    tpu.vector_store %arg6[%c0_10, %c0_11], %11 {strides = array<i32>} : memref<104x128xf32, #tpu.memory_space<vmem>>, vector<104x128xf32>,
    return
  }
  func.func @transform_0(%arg0: i32) -> (i32, i32) {
    %c0_i32 = arith.constant 0 : i32
    %c0_i32_0 = arith.constant 0 : i32
    return %arg0, %c0_i32 : i32, i32
  }
  func.func @transform_1(%arg0: i32) -> (i32, i32) {
    %c0_i32 = arith.constant 0 : i32
    %c0_i32_0 = arith.constant 0 : i32
    %c0_i32_1 = arith.constant 0 : i32
    return %c0_i32, %c0_i32_0 : i32, i32
  }
  func.func @transform_2(%arg0: i32) -> (i32, i32) {
    %c0_i32 = arith.constant 0 : i32
    %c0_i32_0 = arith.constant 0 : i32
    %c0_i32_1 = arith.constant 0 : i32
    return %c0_i32, %c0_i32_0 : i32, i32
  }
  func.func @transform_3(%arg0: i32) -> (i32, i32) {
    %c0_i32 = arith.constant 0 : i32
    %c0_i32_0 = arith.constant 0 : i32
    %c0_i32_1 = arith.constant 0 : i32
    return %c0_i32, %c0_i32_0 : i32, i32
  }
  func.func @transform_4(%arg0: i32) -> (i32, i32) {
    %c0_i32 = arith.constant 0 : i32
    %c0_i32_0 = arith.constant 0 : i32
    %c0_i32_1 = arith.constant 0 : i32
    return %c0_i32, %c0_i32_0 : i32, i32
  }
  func.func @transform_5(%arg0: i32) -> (i32, i32) {
    %c0_i32 = arith.constant 0 : i32
    %c0_i32_0 = arith.constant 0 : i32
    return %arg0, %c0_i32 : i32, i32
  }
}

</mosaic_0001>

<llo_original>
// kernel: tpu_custom_call.1
$region0: #{tpu_custom_call.1}
  #allocation0 [shape = 'u32[]', space=smem, size = 0x4, offset = 0x4, fixed_abs, tag = 'smem constant byte address 0x4 - core index']
  #allocation1 [shape = 'u32[144,128]{1,0:T(1,128)}', space=vmem, size = 0x12000, scoped, tag = 'internal scratch']
  %s0 = inlined_call_operand.vmem [shape: f32[208,8], index: 0, kind: input, shape index: {}]
  %s1 = inlined_call_operand.vmem [shape: f32[8,128], index: 1, kind: input, shape index: {}]
  %s2 = inlined_call_operand.vmem [shape: f32[1,128], index: 2, kind: input, shape index: {}]
  %s3 = inlined_call_operand.vmem [shape: f32[128,128], index: 3, kind: input, shape index: {}]
  %s4 = inlined_call_operand.vmem [shape: f32[1,128], index: 4, kind: input, shape index: {}]
  %s5 = inlined_call_operand.hbm [shape: f32[208,128], index: 5, kind: output, shape index: {}]
  %s6 = sld [smem:[#allocation0]]
  $region53: #{tpu_custom_call.1} parent=0
    _
  %s8 = ssub.s32 1, %s6
  %s9 = scalar_select 0, %s8, %s6
  $region1: #{tpu_custom_call.1} parent=0
    #allocation2 [shape = 'u8[106496]{0}', space=vmem, size = 0x1a000, scoped, tag = 'output window, operand 0']
    #allocation3 [shape = 's32[2]{0}', space=sflag, size = 0x8, scoped, tag = 'scoped memory for tpu_custom_call.1']
    %10 = vsyncpa [#allocation3], 0
    %s11 = scalar_lea.sflag [#allocation3], 1
    %12 = vsyncpa %s11, 0
    loop: start=0, step=1, limit=4
    $region2: #{tpu_custom_call.1} parent=1 // loop_pre_header
      _
    $region3: #{tpu_custom_call.1} parent=1 // loop_header
      %s14 = sphi 0, %s18
      %p15 = scmp.ge.s32.totalorder %s14, 4
      %s24 = sphi 0, %s26
      %s27 = sphi 0, %s24
      %s28 = sphi 0, %s27
      %s44 = sphi 0, %s28
      %s48 = sphi 0, %s48
      %s50 = sphi 0, %s48
      %s51 = sphi 0, %s50
      %s65 = sphi 0, %s51
      %s69 = sphi 0, %s69
      %s71 = sphi 0, %s69
      %s72 = sphi 0, %s71
      %s86 = sphi 0, %s72
      %s90 = sphi 0, %s90
      %s92 = sphi 0, %s90
      %s93 = sphi 0, %s92
      %s107 = sphi 0, %s93
      %s111 = sphi 0, %s111
      %s113 = sphi 0, %s111
      %s114 = sphi 0, %s113
      %s128 = sphi 0, %s114
      %s134 = sphi 0, %s136
      %s137 = sphi 0, %s134
      %s138 = sphi 0, %s137
      %s154 = sphi 0, %s138
    $region4: #{tpu_custom_call.1} parent=1 // loop_header_branch
      %17 = sbr.rel (%p15) target = $region8
    $region5: #{tpu_custom_call.1} parent=1 // loop_body
      %s19 = ssub.s32 %s14, 1
      %s20 = ssub.s32 %s14, 2
      %s21 = sadd.s32 %s14, 1
      %s22 = ssub.s32 %s14, %s21
      %p23 = scmp.eq.s32.totalorder %s22, 0
      %s25 = sadd.s32 %s24, 1
      %s26 = scalar_select %p23, %s24, %s25
      %p29 = pneg %p23
      %p30 = scmp.eq.s32.totalorder %s14, 1
      %p31 = por %p29, %p30
      %p32 = scmp.ne.s32.totalorder %s24, %s27
      %p33 = scmp.eq.s32.totalorder %s14, 0
      %p34 = por %p32, %p33
      %p35 = scmp.ne.s32.totalorder %s24, %s27
      %p36 = scmp.eq.s32.totalorder %s19, 1
      %p37 = por %p35, %p36
      %p38 = scmp.ne.s32.totalorder %s27, %s28
      %p39 = scmp.eq.s32.totalorder %s19, 0
      %p40 = por %p38, %p39
      %p41 = scmp.ne.s32.totalorder %s27, %s28
      %p42 = scmp.eq.s32.totalorder %s20, 1
      %p43 = por %p41, %p42
      %p45 = scmp.ne.s32.totalorder %s28, %s44
      %p46 = scmp.eq.s32.totalorder %s20, 0
      %p47 = por %p45, %p46
      %s49 = sadd.s32 %s48, 1
      %p52 = scmp.eq.s32.totalorder %s14, 1
      %p53 = scmp.ne.s32.totalorder %s48, %s50
      %p54 = scmp.eq.s32.totalorder %s14, 0
      %p55 = por %p53, %p54
      %p56 = scmp.ne.s32.totalorder %s48, %s50
      %p57 = scmp.eq.s32.totalorder %s19, 1
      %p58 = por %p56, %p57
      %p59 = scmp.ne.s32.totalorder %s50, %s51
      %p60 = scmp.eq.s32.totalorder %s19, 0
      %p61 = por %p59, %p60
      %p62 = scmp.ne.s32.totalorder %s50, %s51
      %p63 = scmp.eq.s32.totalorder %s20, 1
      %p64 = por %p62, %p63
      %p66 = scmp.ne.s32.totalorder %s51, %s65
      %p67 = scmp.eq.s32.totalorder %s20, 0
      %p68 = por %p66, %p67
      %s70 = sadd.s32 %s69, 1
      %p73 = scmp.eq.s32.totalorder %s14, 1
      %p74 = scmp.ne.s32.totalorder %s69, %s71
      %p75 = scmp.eq.s32.totalorder %s14, 0
      %p76 = por %p74, %p75
      %p77 = scmp.ne.s32.totalorder %s69, %s71
      %p78 = scmp.eq.s32.totalorder %s19, 1
      %p79 = por %p77, %p78
      %p80 = scmp.ne.s32.totalorder %s71, %s72
      %p81 = scmp.eq.s32.totalorder %s19, 0
      %p82 = por %p80, %p81
      %p83 = scmp.ne.s32.totalorder %s71, %s72
      %p84 = scmp.eq.s32.totalorder %s20, 1
      %p85 = por %p83, %p84
      %p87 = scmp.ne.s32.totalorder %s72, %s86
      %p88 = scmp.eq.s32.totalorder %s20, 0
      %p89 = por %p87, %p88
      %s91 = sadd.s32 %s90, 1
      %p94 = scmp.eq.s32.totalorder %s14, 1
      %p95 = scmp.ne.s32.totalorder %s90, %s92
      %p96 = scmp.eq.s32.totalorder %s14, 0
      %p97 = por %p95, %p96
      %p98 = scmp.ne.s32.totalorder %s90, %s92
      %p99 = scmp.eq.s32.totalorder %s19, 1
      %p100 = por %p98, %p99
      %p101 = scmp.ne.s32.totalorder %s92, %s93
      %p102 = scmp.eq.s32.totalorder %s19, 0
      %p103 = por %p101, %p102
      %p104 = scmp.ne.s32.totalorder %s92, %s93
      %p105 = scmp.eq.s32.totalorder %s20, 1
      %p106 = por %p104, %p105
      %p108 = scmp.ne.s32.totalorder %s93, %s107
      %p109 = scmp.eq.s32.totalorder %s20, 0
      %p110 = por %p108, %p109
      %s112 = sadd.s32 %s111, 1
      %p115 = scmp.eq.s32.totalorder %s14, 1
      %p116 = scmp.ne.s32.totalorder %s111, %s113
      %p117 = scmp.eq.s32.totalorder %s14, 0
      %p118 = por %p116, %p117
      %p119 = scmp.ne.s32.totalorder %s111, %s113
      %p120 = scmp.eq.s32.totalorder %s19, 1
      %p121 = por %p119, %p120
      %p122 = scmp.ne.s32.totalorder %s113, %s114
      %p123 = scmp.eq.s32.totalorder %s19, 0
      %p124 = por %p122, %p123
      %p125 = scmp.ne.s32.totalorder %s113, %s114
      %p126 = scmp.eq.s32.totalorder %s20, 1
      %p127 = por %p125, %p126
      %p129 = scmp.ne.s32.totalorder %s114, %s128
      %p130 = scmp.eq.s32.totalorder %s20, 0
      %p131 = por %p129, %p130
      %s132 = ssub.s32 %s14, %s21
      %p133 = scmp.eq.s32.totalorder %s132, 0
      %s135 = sadd.s32 %s134, 1
      %s136 = scalar_select %p133, %s134, %s135
      %p139 = pneg %p133
      %p140 = scmp.eq.s32.totalorder %s14, 1
      %p141 = por %p139, %p140
      %p142 = scmp.ne.s32.totalorder %s134, %s137
      %p143 = scmp.eq.s32.totalorder %s14, 0
      %p144 = por %p142, %p143
      %p145 = scmp.ne.s32.totalorder %s134, %s137
      %p146 = scmp.eq.s32.totalorder %s19, 1
      %p147 = por %p145, %p146
      %p148 = scmp.ne.s32.totalorder %s137, %s138
      %p149 = scmp.eq.s32.totalorder %s19, 0
      %p150 = por %p148, %p149
      %p151 = scmp.ne.s32.totalorder %s137, %s138
      %p152 = scmp.eq.s32.totalorder %s20, 1
      %p153 = por %p151, %p152
      %p155 = scmp.ne.s32.totalorder %s138, %s154
      %p156 = scmp.eq.s32.totalorder %s20, 0
      %p157 = por %p155, %p156
      %p158 = scmp.le.s32.totalorder 1, %s14
      %p159 = scmp.lt.s32.totalorder %s14, 3
      %p160 = pnand %p158, %p159
      %p161 = pneg %p160
      // Predicated region
      $region9: #{tpu_custom_call.1} parent=5 // pred_check
        _
      $region10: #{tpu_custom_call.1} parent=5 // pred_check_branch
        %163 = sbr.rel (%p160) target = $region12
      $region11: #{tpu_custom_call.1} parent=5 // pred_region
        %s164 = ssub.s32 %s14, 1
        // Predicated region
        $region13: #{tpu_custom_call.1} parent=11 // pred_check
          %p165 = pneg %p61
        $region14: #{tpu_custom_call.1} parent=11 // pred_check_branch
          %167 = sbr.rel (%p165) target = $region16
        $region15: #{tpu_custom_call.1} parent=11 // pred_region
          _
        $region16: #{tpu_custom_call.1} parent=11 // pred_fallthru
          _
        // Predicated region
        $region17: #{tpu_custom_call.1} parent=11 // pred_check
          %p168 = pneg %p82
        $region18: #{tpu_custom_call.1} parent=11 // pred_check_branch
          %170 = sbr.rel (%p168) target = $region20
        $region19: #{tpu_custom_call.1} parent=11 // pred_region
          _
        $region20: #{tpu_custom_call.1} parent=11 // pred_fallthru
          _
        // Predicated region
        $region21: #{tpu_custom_call.1} parent=11 // pred_check
          %p171 = pneg %p103
        $region22: #{tpu_custom_call.1} parent=11 // pred_check_branch
          %173 = sbr.rel (%p171) target = $region24
        $region23: #{tpu_custom_call.1} parent=11 // pred_region
          _
        $region24: #{tpu_custom_call.1} parent=11 // pred_fallthru
          _
        // Predicated region
        $region25: #{tpu_custom_call.1} parent=11 // pred_check
          %p174 = pneg %p124
        $region26: #{tpu_custom_call.1} parent=11 // pred_check_branch
          %176 = sbr.rel (%p174) target = $region28
        $region27: #{tpu_custom_call.1} parent=11 // pred_region
          _
        $region28: #{tpu_custom_call.1} parent=11 // pred_fallthru
          _
      $region12: #{tpu_custom_call.1} parent=5 // pred_fallthru
        _
      %p177 = scmp.lt.s32.totalorder %s14, 2
      // Predicated region
      $region29: #{tpu_custom_call.1} parent=5 // pred_check
        %p178 = pneg %p177
      $region30: #{tpu_custom_call.1} parent=5 // pred_check_branch
        %180 = sbr.rel (%p178) target = $region32
      $region31: #{tpu_custom_call.1} parent=5 // pred_region
        // Predicated region
        $region33: #{tpu_custom_call.1} parent=31 // pred_check
          %p181 = pneg %p34
        $region34: #{tpu_custom_call.1} parent=31 // pred_check_branch
          %183 = sbr.rel (%p181) target = $region36
        $region35: #{tpu_custom_call.1} parent=31 // pred_region
          %s184 = smul.u32 13, %s14
          %p185 = scmp.lt.s32.totalorder %s184, 25
          %s186 = scalar_select %p185, %s184, 25
          %s187 = smul.addr %s186, 8
          %s188 = scalar_lea.vmem %s0, %s187
          %s189 = smul.u32 13, %s14
        $region36: #{tpu_custom_call.1} parent=31 // pred_fallthru
          _
      $region32: #{tpu_custom_call.1} parent=5 // pred_fallthru
        _
      %p190 = scmp.le.s32.totalorder 1, %s14
      %p191 = scmp.lt.s32.totalorder %s14, 3
      %p192 = pnand %p190, %p191
      %p193 = pneg %p192
      // Predicated region
      $region37: #{tpu_custom_call.1} parent=5 // pred_check
        _
      $region38: #{tpu_custom_call.1} parent=5 // pred_check_branch
        %195 = sbr.rel (%p192) target = $region40
      $region39: #{tpu_custom_call.1} parent=5 // pred_region
        %s196 = ssub.s32 %s14, 1
        %s197 = smul.u32 13, %s19
        %p198 = scmp.lt.s32.totalorder %s197, 25
        %s199 = scalar_select %p198, %s197, 25
        %s200 = smul.addr %s199, 8
        %s201 = scalar_lea.vmem %s0, %s200
        %p202 = pneg %p40
        %p203 = pneg %p37
        %p204 = pneg %p61
        %p205 = pneg %p58
        %p206 = pneg %p82
        %p207 = pneg %p79
        %p208 = pneg %p103
        %p209 = pneg %p100
        %p210 = pneg %p124
        %p211 = pneg %p121
        %p212 = pneg %p150
        %p213 = pneg %p147
        %s214 = sand.u32 %s137, 1
        %s215 = scalar_lea.sflag [#allocation3], %s214
        %s216 = sand.u32 %s137, 1
        %s217 = smul.addr %s216, 104
        %s218 = scalar_lea.vmem [#allocation2], %s217
        %s219 = smul.u32 13, %s19
        %p220 = scmp.lt.s32.totalorder %s219, 25
        %s221 = scalar_select %p220, %s219, 25
        %s222 = smul.addr %s221, 8
        %s223 = scalar_lea.vmem %s0, %s222
        %s224 = smul.u32 13, %s19
        %s225 = smul.u32 13, %s19
        %v226 = vld [vmem:[%s223] sm:$0xff]
        %v227 = vld [vmem:[%s223 + $0x8] sm:$0xff]
        %v228 = vld [vmem:[%s223 + $0x10] sm:$0xff]
        %v229 = vld [vmem:[%s223 + $0x18] sm:$0xff]
        %v230 = vld [vmem:[%s223 + $0x20] sm:$0xff]
        %v231 = vld [vmem:[%s223 + $0x28] sm:$0xff]
        %v232 = vld [vmem:[%s223 + $0x30] sm:$0xff]
        %v233 = vld [vmem:[%s223 + $0x38] sm:$0xff]
        %v234 = vld [vmem:[%s223 + $0x40] sm:$0xff]
        %v235 = vld [vmem:[%s223 + $0x48] sm:$0xff]
        %v236 = vld [vmem:[%s223 + $0x50] sm:$0xff]
        %v237 = vld [vmem:[%s223 + $0x58] sm:$0xff]
        %v238 = vld [vmem:[%s223 + $0x60] sm:$0xff]
        %v239 = vld [vmem:[%s1] sm:$0xff]
        %v240 = vld [vmem:[%s2] sm:$0x1]
        %v242 = vlaneseq
        %v243 = vshrl.u32 %v242, 7
        %v244 = vsub.s32 0, %v243
        %v245 = vrot.slane %v240, %v244
        %vm247 = vcmask 64512
        %v249 = vsel %vm247, %v226, 0
        %v252 = vsel %vm247, %v227, 0
        %v255 = vsel %vm247, %v228, 0
        %v258 = vsel %vm247, %v229, 0
        %v261 = vsel %vm247, %v230, 0
        %v264 = vsel %vm247, %v231, 0
        %v267 = vsel %vm247, %v232, 0
        %v270 = vsel %vm247, %v233, 0
        %v273 = vsel %vm247, %v234, 0
        %v276 = vsel %vm247, %v235, 0
        %v279 = vsel %vm247, %v236, 0
        %v282 = vsel %vm247, %v237, 0
        %v285 = vsel %vm247, %v238, 0
        %287 = vmatprep.subr.mxu0 0.0
        %288 = vmatpush1.msra.mxu0 %v239
        %289 = vmatprep.subr.mxu0 0.0
        %290 = vmatpush1.msra.mxu0 0.0
        %291 = vmatprep.subr.mxu0 0.0
        %292 = vmatpush1.msra.mxu0 0.0
        %293 = vmatprep.subr.mxu0 0.0
        %294 = vmatpush1.msra.mxu0 0.0
        %295 = vmatprep.subr.mxu0 0.0
        %296 = vmatpush1.msra.mxu0 0.0
        %297 = vmatprep.subr.mxu0 0.0
        %298 = vmatpush1.msra.mxu0 0.0
        %299 = vmatprep.subr.mxu0 0.0
        %300 = vmatpush1.msra.mxu0 0.0
        %301 = vmatprep.subr.mxu0 0.0
        %302 = vmatpush1.msra.mxu0 0.0
        %303 = vmatprep.subr.mxu0 0.0
        %304 = vmatpush1.msra.mxu0 0.0
        %305 = vmatprep.subr.mxu0 0.0
        %306 = vmatpush1.msra.mxu0 0.0
        %307 = vmatprep.subr.mxu0 0.0
        %308 = vmatpush1.msra.mxu0 0.0
        %309 = vmatprep.subr.mxu0 0.0
        %310 = vmatpush1.msra.mxu0 0.0
        %311 = vmatprep.subr.mxu0 0.0
        %312 = vmatpush1.msra.mxu0 0.0
        %313 = vmatprep.subr.mxu0 0.0
        %314 = vmatpush1.msra.mxu0 0.0
        %315 = vmatprep.subr.mxu0 0.0
        %316 = vmatpush1.msra.mxu0 0.0
        %317 = vmatprep.subr.mxu0 0.0
        %318 = vmatpush1.msra.mxu0 0.0
        %319 = vmatprep.subr.mxu0 0.0
        %320 = vmatpush1.msra.mxu0 0.0
        %321 = vmatprep.subr.mxu0 0.0
        %322 = vmatpush1.msra.mxu0 0.0
        %323 = vmatprep.subr.mxu0 0.0
        %324 = vmatpush1.msra.mxu0 0.0
        %325 = vmatprep.subr.mxu0 0.0
        %326 = vmatpush1.msra.mxu0 0.0
        %327 = vmatprep.subr.mxu0 0.0
        %328 = vmatpush1.msra.mxu0 0.0
        %329 = vmatprep.subr.mxu0 0.0
        %330 = vmatpush1.msra.mxu0 0.0
        %331 = vmatprep.subr.mxu0 0.0
        %332 = vmatpush1.msra.mxu0 0.0
        %333 = vmatprep.subr.mxu0 0.0
        %334 = vmatpush1.msra.mxu0 0.0
        %335 = vmatprep.subr.mxu0 0.0
        %336 = vmatpush1.msra.mxu0 0.0
        %337 = vmatprep.subr.mxu0 0.0
        %338 = vmatpush1.msra.mxu0 0.0
        %339 = vmatprep.subr.mxu0 0.0
        %340 = vmatpush1.msra.mxu0 0.0
        %341 = vmatprep.subr.mxu0 0.0
        %342 = vmatpush1.msra.mxu0 0.0
        %343 = vmatprep.subr.mxu0 0.0
        %344 = vmatpush1.msra.mxu0 0.0
        %345 = vmatprep.subr.mxu0 0.0
        %346 = vmatpush1.msra.mxu0 0.0
        %347 = vmatprep.subr.mxu0 0.0
        %348 = vmatpush1.msra.mxu0 0.0
        %349 = vmatprep.subr.mxu0 0.0
        %350 = vmatpush1.msra.mxu0 0.0
        %351 = vmatprep.mubr.f32.mxu0 0.0
        %352 = vmatmul.mubr.f32.gmra.mrb[0].mxu0 %v249
        %v353 = vpop.f32.mrb[0].mxu0
        %v354 = vadd.f32 %v245, %v353
        %v355 = vpop.f32.mrb[0].mxu0
        %356 = vmatprep.mubr.f32.mxu0 0.0
        %357 = vmatmul.mubr.f32.gmra.mrb[0].mxu0 %v252
        %v358 = vpop.f32.mrb[0].mxu0
        %v359 = vadd.f32 %v245, %v358
        %v360 = vpop.f32.mrb[0].mxu0
        %361 = vmatprep.mubr.f32.mxu0 0.0
        %362 = vmatmul.mubr.f32.gmra.mrb[0].mxu0 %v255
        %v363 = vpop.f32.mrb[0].mxu0
        %v364 = vadd.f32 %v245, %v363
        %v365 = vpop.f32.mrb[0].mxu0
        %366 = vmatprep.mubr.f32.mxu0 0.0
        %367 = vmatmul.mubr.f32.gmra.mrb[0].mxu0 %v258
        %v368 = vpop.f32.mrb[0].mxu0
        %v369 = vadd.f32 %v245, %v368
        %v370 = vpop.f32.mrb[0].mxu0
        %371 = vmatprep.mubr.f32.mxu0 0.0
        %372 = vmatmul.mubr.f32.gmra.mrb[0].mxu0 %v261
        %v373 = vpop.f32.mrb[0].mxu0
        %v374 = vadd.f32 %v245, %v373
        %v375 = vpop.f32.mrb[0].mxu0
        %376 = vmatprep.mubr.f32.mxu0 0.0
        %377 = vmatmul.mubr.f32.gmra.mrb[0].mxu0 %v264
        %v378 = vpop.f32.mrb[0].mxu0
        %v379 = vadd.f32 %v245, %v378
        %v380 = vpop.f32.mrb[0].mxu0
        %381 = vmatprep.mubr.f32.mxu0 0.0
        %382 = vmatmul.mubr.f32.gmra.mrb[0].mxu0 %v267
        %v383 = vpop.f32.mrb[0].mxu0
        %v384 = vadd.f32 %v245, %v383
        %v385 = vpop.f32.mrb[0].mxu0
        %386 = vmatprep.mubr.f32.mxu0 0.0
        %387 = vmatmul.mubr.f32.gmra.mrb[0].mxu0 %v270
        %v388 = vpop.f32.mrb[0].mxu0
        %v389 = vadd.f32 %v245, %v388
        %v390 = vpop.f32.mrb[0].mxu0
        %391 = vmatprep.mubr.f32.mxu0 0.0
        %392 = vmatmul.mubr.f32.gmra.mrb[0].mxu0 %v273
        %v393 = vpop.f32.mrb[0].mxu0
        %v394 = vadd.f32 %v245, %v393
        %v395 = vpop.f32.mrb[0].mxu0
        %396 = vmatprep.mubr.f32.mxu0 0.0
        %397 = vmatmul.mubr.f32.gmra.mrb[0].mxu0 %v276
        %v398 = vpop.f32.mrb[0].mxu0
        %v399 = vadd.f32 %v245, %v398
        %v400 = vpop.f32.mrb[0].mxu0
        %401 = vmatprep.mubr.f32.mxu0 0.0
        %402 = vmatmul.mubr.f32.gmra.mrb[0].mxu0 %v279
        %v403 = vpop.f32.mrb[0].mxu0
        %v404 = vadd.f32 %v245, %v403
        %v405 = vpop.f32.mrb[0].mxu0
        %406 = vmatprep.mubr.f32.mxu0 0.0
        %407 = vmatmul.mubr.f32.gmra.mrb[0].mxu0 %v282
        %v408 = vpop.f32.mrb[0].mxu0
        %v409 = vadd.f32 %v245, %v408
        %v410 = vpop.f32.mrb[0].mxu0
        %411 = vmatprep.mubr.f32.mxu0 0.0
        %412 = vmatmul.mubr.f32.gmra.mrb[0].mxu0 %v285
        %v413 = vpop.f32.mrb[0].mxu0
        %v414 = vadd.f32 %v245, %v413
        %v415 = vpop.f32.mrb[0].mxu0
        %416 = vdwg.mxu0
        %v417 = vand.u32 2147483647, %v354
        %vm418 = vcmp.le.f32.partialorder %v417, 0.7853982
        %vm419 = vcmp.lt.s32.totalorder %v354, 0
        %v420 = vand.u32 %v354, 2139095040
        %v421 = vshrl.u32 %v420, 23
        %v422 = vsub.s32 %v421, 127
        %v423 = vand.u32 2147483647, %v354
        %v424 = vand.u32 %v423, 8388607
        %v425 = vor.u32 %v424, 8388608
        %v426 = vsub.s32 0, %v425
        %v427 = vadd.s32 %v422, 1
        %vm428 = vcmp.gt.s32.totalorder %v427, 0
        %v429 = vsel %vm428, %v427, 0
        %v430 = vshrl.u32 %v429, 5
        %v431 = vand.u32 %v429, 31
        %v432 = vsub.s32 32, %v431
        %v433 = vshrl.u32 683565275, %v432
        %v434 = vshll.u32 683565275, %v431
        %v435 = vshrl.u32 2475754826, %v432
        %v436 = vor.u32 %v434, %v435
        %v437 = vshll.u32 2475754826, %v431
        %v438 = vshrl.u32 2131351028, %v432
        %v439 = vor.u32 %v437, %v438
        %v440 = vshll.u32 2131351028, %v431
        %v441 = vshrl.u32 2102212464, %v432
        %v442 = vor.u32 %v440, %v441
        %v443 = vshll.u32 2102212464, %v431
        %v444 = vshrl.u32 920167782, %v432
        %v445 = vor.u32 %v443, %v444
        %v446 = vshll.u32 920167782, %v431
        %v447 = vshrl.u32 1326507024, %v432
        %v448 = vor.u32 %v446, %v447
        %vm449 = vcmp.lt.s32.totalorder %v430, 1
        %vm450 = vcmp.lt.s32.totalorder %v430, 2
        %vm451 = vcmp.lt.s32.totalorder %v430, 3
        %vm452 = vcmp.lt.s32.totalorder %v430, 4
        %v453 = vsel %vm449, %v433, %v436
        %v454 = vsel %vm452, %v442, 2102212464
        %v455 = vsel %vm451, %v439, %v454
        %v456 = vsel %vm450, %v453, %v455
        %v457 = vsel %vm449, %v436, %v439
        %v458 = vsel %vm452, %v445, 920167782
        %v459 = vsel %vm451, %v442, %v458
        %v460 = vsel %vm450, %v457, %v459
        %v461 = vsel %vm449, %v439, %v442
        %v462 = vsel %vm452, %v448, 1326507024
        %v463 = vsel %vm451, %v445, %v462
        %v464 = vsel %vm450, %v461, %v463
        %v465 = vshll.u32 %v425, 8
        %v466 = vmul.u32.u64.compose %v465, %v464
        %v467 = vextract.low.u32 %v466
        %v468 = vextract.high.u32 %v466
        %v469 = vmul.u32.u64.compose %v465, %v460
        %v470 = vextract.low.u32 %v469
        %v471 = vextract.high.u32 %v469
        %v472 = vmul.u32 %v465, %v456
        %v473 = vadd.s32 %v468, %v470
        %vm474 = vc.u32 %v468, %v470
        %v475 = vadd.s32 %v471, 1
        %v476 = vsel %vm474, %v475, %v471
        %v477 = vadd.s32 %v472, %v476
        %v478 = vadd.s32 %v477, 536870912
        %v479 = vshrl.u32 %v478, 30
        %v480 = vshll.u32 %v479, 30
        %v481 = vsub.s32 %v477, %v480
        %vm482 = vcmp.lt.s32.totalorder %v481, 0
        %v483 = vsub.s32 0, %v481
        %v484 = vsel %vm482, %v483, %v481
        %v485 = vclz %v484
        %v486 = vsub.s32 %v485, 2
        %vm487 = vcmp.gt.s32.totalorder 0, %v486
        %v488 = vsel %vm487, 0, %v486
        %v489 = vsub.s32 32, %v488
        %v490 = vshll.u32 %v481, %v488
        %v491 = vshrl.u32 %v473, %v489
        %v492 = vor.u32 %v490, %v491
        %v493 = vsub.s32 4294967266, %v488
        %v494 = vadd.s32 %v493, 127
        %v495 = vshll.u32 %v494, 23
        %v496 = vor.u32 4788187, %v495
        %v497 = vand.u32 2147483647, %v496
        %v499 = vcvt.s32.f32 %v492
        %v500 = vmul.f32 %v499, %v497
        %v501 = vxor.u32 %v500, 2147483648
        %v502 = vsel %vm419, %v501, %v500
        %v503 = vsub.s32 4, %v479
        %v504 = vsel %vm419, %v503, %v479
        %v505 = vsel %vm418, %v354, %v502
        %v506 = vsel %vm418, 0, %v504
        %v507 = vcosq.f32.pop %v505
        %v508 = vsinq.f32.pop %v505
        %vm509 = vweird.f32 %v354
        %v510 = vadd.s32 %v506, 3
        %v511 = vand.u32 %v510, 3
        %vm512 = vcmp.lt.s32.totalorder %v511, 2
        %vm513 = vcmp.eq.s32.totalorder %v511, 0
        %v514 = vxor.u32 %v508, 2147483648
        %v515 = vsel %vm513, %v507, %v514
        %vm516 = vcmp.eq.s32.totalorder %v511, 2
        %v517 = vxor.u32 %v507, 2147483648
        %v518 = vsel %vm516, %v517, %v508
        %v519 = vsel %vm512, %v515, %v518
        %v520 = vsel %vm509, nan, %v519
        %v521 = vand.u32 2147483647, %v359
        %vm522 = vcmp.le.f32.partialorder %v521, 0.7853982
        %vm523 = vcmp.lt.s32.totalorder %v359, 0
        %v524 = vand.u32 %v359, 2139095040
        %v525 = vshrl.u32 %v524, 23
        %v526 = vsub.s32 %v525, 127
        %v527 = vand.u32 2147483647, %v359
        %v528 = vand.u32 %v527, 8388607
        %v529 = vor.u32 %v528, 8388608
        %v530 = vsub.s32 0, %v529
        %v531 = vadd.s32 %v526, 1
        %vm532 = vcmp.gt.s32.totalorder %v531, 0
        %v533 = vsel %vm532, %v531, 0
        %v534 = vshrl.u32 %v533, 5
        %v535 = vand.u32 %v533, 31
        %v536 = vsub.s32 32, %v535
        %v537 = vshrl.u32 683565275, %v536
        %v538 = vshll.u32 683565275, %v535
        %v539 = vshrl.u32 2475754826, %v536
        %v540 = vor.u32 %v538, %v539
        %v541 = vshll.u32 2475754826, %v535
        %v542 = vshrl.u32 2131351028, %v536
        %v543 = vor.u32 %v541, %v542
        %v544 = vshll.u32 2131351028, %v535
        %v545 = vshrl.u32 2102212464, %v536
        %v546 = vor.u32 %v544, %v545
        %v547 = vshll.u32 2102212464, %v535
        %v548 = vshrl.u32 920167782, %v536
        %v549 = vor.u32 %v547, %v548
        %v550 = vshll.u32 920167782, %v535
        %v551 = vshrl.u32 1326507024, %v536
        %v552 = vor.u32 %v550, %v551
        %vm553 = vcmp.lt.s32.totalorder %v534, 1
        %vm554 = vcmp.lt.s32.totalorder %v534, 2
        %vm555 = vcmp.lt.s32.totalorder %v534, 3
        %vm556 = vcmp.lt.s32.totalorder %v534, 4
        %v557 = vsel %vm553, %v537, %v540
        %v558 = vsel %vm556, %v546, 2102212464
        %v559 = vsel %vm555, %v543, %v558
        %v560 = vsel %vm554, %v557, %v559
        %v561 = vsel %vm553, %v540, %v543
        %v562 = vsel %vm556, %v549, 920167782
        %v563 = vsel %vm555, %v546, %v562
        %v564 = vsel %vm554, %v561, %v563
        %v565 = vsel %vm553, %v543, %v546
        %v566 = vsel %vm556, %v552, 1326507024
        %v567 = vsel %vm555, %v549, %v566
        %v568 = vsel %vm554, %v565, %v567
        %v569 = vshll.u32 %v529, 8
        %v570 = vmul.u32.u64.compose %v569, %v568
        %v571 = vextract.low.u32 %v570
        %v572 = vextract.high.u32 %v570
        %v573 = vmul.u32.u64.compose %v569, %v564
        %v574 = vextract.low.u32 %v573
        %v575 = vextract.high.u32 %v573
        %v576 = vmul.u32 %v569, %v560
        %v577 = vadd.s32 %v572, %v574
        %vm578 = vc.u32 %v572, %v574
        %v579 = vadd.s32 %v575, 1
        %v580 = vsel %vm578, %v579, %v575
        %v581 = vadd.s32 %v576, %v580
        %v582 = vadd.s32 %v581, 536870912
        %v583 = vshrl.u32 %v582, 30
        %v584 = vshll.u32 %v583, 30
        %v585 = vsub.s32 %v581, %v584
        %vm586 = vcmp.lt.s32.totalorder %v585, 0
        %v587 = vsub.s32 0, %v585
        %v588 = vsel %vm586, %v587, %v585
        %v589 = vclz %v588
        %v590 = vsub.s32 %v589, 2
        %vm591 = vcmp.gt.s32.totalorder 0, %v590
        %v592 = vsel %vm591, 0, %v590
        %v593 = vsub.s32 32, %v592
        %v594 = vshll.u32 %v585, %v592
        %v595 = vshrl.u32 %v577, %v593
        %v596 = vor.u32 %v594, %v595
        %v597 = vsub.s32 4294967266, %v592
        %v598 = vadd.s32 %v597, 127
        %v599 = vshll.u32 %v598, 23
        %v600 = vor.u32 4788187, %v599
        %v601 = vand.u32 2147483647, %v600
        %v603 = vcvt.s32.f32 %v596
        %v604 = vmul.f32 %v603, %v601
        %v605 = vxor.u32 %v604, 2147483648
        %v606 = vsel %vm523, %v605, %v604
        %v607 = vsub.s32 4, %v583
        %v608 = vsel %vm523, %v607, %v583
        %v609 = vsel %vm522, %v359, %v606
        %v610 = vsel %vm522, 0, %v608
        %v611 = vcosq.f32.pop %v609
        %v612 = vsinq.f32.pop %v609
        %vm613 = vweird.f32 %v359
        %v614 = vadd.s32 %v610, 3
        %v615 = vand.u32 %v614, 3
        %vm616 = vcmp.lt.s32.totalorder %v615, 2
        %vm617 = vcmp.eq.s32.totalorder %v615, 0
        %v618 = vxor.u32 %v612, 2147483648
        %v619 = vsel %vm617, %v611, %v618
        %vm620 = vcmp.eq.s32.totalorder %v615, 2
        %v621 = vxor.u32 %v611, 2147483648
        %v622 = vsel %vm620, %v621, %v612
        %v623 = vsel %vm616, %v619, %v622
        %v624 = vsel %vm613, nan, %v623
        %v625 = vand.u32 2147483647, %v364
        %vm626 = vcmp.le.f32.partialorder %v625, 0.7853982
        %vm627 = vcmp.lt.s32.totalorder %v364, 0
        %v628 = vand.u32 %v364, 2139095040
        %v629 = vshrl.u32 %v628, 23
        %v630 = vsub.s32 %v629, 127
        %v631 = vand.u32 2147483647, %v364
        %v632 = vand.u32 %v631, 8388607
        %v633 = vor.u32 %v632, 8388608
        %v634 = vsub.s32 0, %v633
        %v635 = vadd.s32 %v630, 1
        %vm636 = vcmp.gt.s32.totalorder %v635, 0
        %v637 = vsel %vm636, %v635, 0
        %v638 = vshrl.u32 %v637, 5
        %v639 = vand.u32 %v637, 31
        %v640 = vsub.s32 32, %v639
        %v641 = vshrl.u32 683565275, %v640
        %v642 = vshll.u32 683565275, %v639
        %v643 = vshrl.u32 2475754826, %v640
        %v644 = vor.u32 %v642, %v643
        %v645 = vshll.u32 2475754826, %v639
        %v646 = vshrl.u32 2131351028, %v640
        %v647 = vor.u32 %v645, %v646
        %v648 = vshll.u32 2131351028, %v639
        %v649 = vshrl.u32 2102212464, %v640
        %v650 = vor.u32 %v648, %v649
        %v651 = vshll.u32 2102212464, %v639
        %v652 = vshrl.u32 920167782, %v640
        %v653 = vor.u32 %v651, %v652
        %v654 = vshll.u32 920167782, %v639
        %v655 = vshrl.u32 1326507024, %v640
        %v656 = vor.u32 %v654, %v655
        %vm657 = vcmp.lt.s32.totalorder %v638, 1
        %vm658 = vcmp.lt.s32.totalorder %v638, 2
        %vm659 = vcmp.lt.s32.totalorder %v638, 3
        %vm660 = vcmp.lt.s32.totalorder %v638, 4
        %v661 = vsel %vm657, %v641, %v644
        %v662 = vsel %vm660, %v650, 2102212464
        %v663 = vsel %vm659, %v647, %v662
        %v664 = vsel %vm658, %v661, %v663
        %v665 = vsel %vm657, %v644, %v647
        %v666 = vsel %vm660, %v653, 920167782
        %v667 = vsel %vm659, %v650, %v666
        %v668 = vsel %vm658, %v665, %v667
        %v669 = vsel %vm657, %v647, %v650
        %v670 = vsel %vm660, %v656, 1326507024
        %v671 = vsel %vm659, %v653, %v670
        %v672 = vsel %vm658, %v669, %v671
        %v673 = vshll.u32 %v633, 8
        %v674 = vmul.u32.u64.compose %v673, %v672
        %v675 = vextract.low.u32 %v674
        %v676 = vextract.high.u32 %v674
        %v677 = vmul.u32.u64.compose %v673, %v668
        %v678 = vextract.low.u32 %v677
        %v679 = vextract.high.u32 %v677
        %v680 = vmul.u32 %v673, %v664
        %v681 = vadd.s32 %v676, %v678
        %vm682 = vc.u32 %v676, %v678
        %v683 = vadd.s32 %v679, 1
        %v684 = vsel %vm682, %v683, %v679
        %v685 = vadd.s32 %v680, %v684
        %v686 = vadd.s32 %v685, 536870912
        %v687 = vshrl.u32 %v686, 30
        %v688 = vshll.u32 %v687, 30
        %v689 = vsub.s32 %v685, %v688
        %vm690 = vcmp.lt.s32.totalorder %v689, 0
        %v691 = vsub.s32 0, %v689
        %v692 = vsel %vm690, %v691, %v689
        %v693 = vclz %v692
        %v694 = vsub.s32 %v693, 2
        %vm695 = vcmp.gt.s32.totalorder 0, %v694
        %v696 = vsel %vm695, 0, %v694
        %v697 = vsub.s32 32, %v696
        %v698 = vshll.u32 %v689, %v696
        %v699 = vshrl.u32 %v681, %v697
        %v700 = vor.u32 %v698, %v699
        %v701 = vsub.s32 4294967266, %v696
        %v702 = vadd.s32 %v701, 127
        %v703 = vshll.u32 %v702, 23
        %v704 = vor.u32 4788187, %v703
        %v705 = vand.u32 2147483647, %v704
        %v707 = vcvt.s32.f32 %v700
        %v708 = vmul.f32 %v707, %v705
        %v709 = vxor.u32 %v708, 2147483648
        %v710 = vsel %vm627, %v709, %v708
        %v711 = vsub.s32 4, %v687
        %v712 = vsel %vm627, %v711, %v687
        %v713 = vsel %vm626, %v364, %v710
        %v714 = vsel %vm626, 0, %v712
        %v715 = vcosq.f32.pop %v713
        %v716 = vsinq.f32.pop %v713
        %vm717 = vweird.f32 %v364
        %v718 = vadd.s32 %v714, 3
        %v719 = vand.u32 %v718, 3
        %vm720 = vcmp.lt.s32.totalorder %v719, 2
        %vm721 = vcmp.eq.s32.totalorder %v719, 0
        %v722 = vxor.u32 %v716, 2147483648
        %v723 = vsel %vm721, %v715, %v722
        %vm724 = vcmp.eq.s32.totalorder %v719, 2
        %v725 = vxor.u32 %v715, 2147483648
        %v726 = vsel %vm724, %v725, %v716
        %v727 = vsel %vm720, %v723, %v726
        %v728 = vsel %vm717, nan, %v727
        %v729 = vand.u32 2147483647, %v369
        %vm730 = vcmp.le.f32.partialorder %v729, 0.7853982
        %vm731 = vcmp.lt.s32.totalorder %v369, 0
        %v732 = vand.u32 %v369, 2139095040
        %v733 = vshrl.u32 %v732, 23
        %v734 = vsub.s32 %v733, 127
        %v735 = vand.u32 2147483647, %v369
        %v736 = vand.u32 %v735, 8388607
        %v737 = vor.u32 %v736, 8388608
        %v738 = vsub.s32 0, %v737
        %v739 = vadd.s32 %v734, 1
        %vm740 = vcmp.gt.s32.totalorder %v739, 0
        %v741 = vsel %vm740, %v739, 0
        %v742 = vshrl.u32 %v741, 5
        %v743 = vand.u32 %v741, 31
        %v744 = vsub.s32 32, %v743
        %v745 = vshrl.u32 683565275, %v744
        %v746 = vshll.u32 683565275, %v743
        %v747 = vshrl.u32 2475754826, %v744
        %v748 = vor.u32 %v746, %v747
        %v749 = vshll.u32 2475754826, %v743
        %v750 = vshrl.u32 2131351028, %v744
        %v751 = vor.u32 %v749, %v750
        %v752 = vshll.u32 2131351028, %v743
        %v753 = vshrl.u32 2102212464, %v744
        %v754 = vor.u32 %v752, %v753
        %v755 = vshll.u32 2102212464, %v743
        %v756 = vshrl.u32 920167782, %v744
        %v757 = vor.u32 %v755, %v756
        %v758 = vshll.u32 920167782, %v743
        %v759 = vshrl.u32 1326507024, %v744
        %v760 = vor.u32 %v758, %v759
        %vm761 = vcmp.lt.s32.totalorder %v742, 1
        %vm762 = vcmp.lt.s32.totalorder %v742, 2
        %vm763 = vcmp.lt.s32.totalorder %v742, 3
        %vm764 = vcmp.lt.s32.totalorder %v742, 4
        %v765 = vsel %vm761, %v745, %v748
        %v766 = vsel %vm764, %v754, 2102212464
        %v767 = vsel %vm763, %v751, %v766
        %v768 = vsel %vm762, %v765, %v767
        %v769 = vsel %vm761, %v748, %v751
        %v770 = vsel %vm764, %v757, 920167782
        %v771 = vsel %vm763, %v754, %v770
        %v772 = vsel %vm762, %v769, %v771
        %v773 = vsel %vm761, %v751, %v754
        %v774 = vsel %vm764, %v760, 1326507024
        %v775 = vsel %vm763, %v757, %v774
        %v776 = vsel %vm762, %v773, %v775
        %v777 = vshll.u32 %v737, 8
        %v778 = vmul.u32.u64.compose %v777, %v776
        %v779 = vextract.low.u32 %v778
        %v780 = vextract.high.u32 %v778
        %v781 = vmul.u32.u64.compose %v777, %v772
        %v782 = vextract.low.u32 %v781
        %v783 = vextract.high.u32 %v781
        %v784 = vmul.u32 %v777, %v768
        %v785 = vadd.s32 %v780, %v782
        %vm786 = vc.u32 %v780, %v782
        %v787 = vadd.s32 %v783, 1
        %v788 = vsel %vm786, %v787, %v783
        %v789 = vadd.s32 %v784, %v788
        %v790 = vadd.s32 %v789, 536870912
        %v791 = vshrl.u32 %v790, 30
        %v792 = vshll.u32 %v791, 30
        %v793 = vsub.s32 %v789, %v792
        %vm794 = vcmp.lt.s32.totalorder %v793, 0
        %v795 = vsub.s32 0, %v793
        %v796 = vsel %vm794, %v795, %v793
        %v797 = vclz %v796
        %v798 = vsub.s32 %v797, 2
        %vm799 = vcmp.gt.s32.totalorder 0, %v798
        %v800 = vsel %vm799, 0, %v798
        %v801 = vsub.s32 32, %v800
        %v802 = vshll.u32 %v793, %v800
        %v803 = vshrl.u32 %v785, %v801
        %v804 = vor.u32 %v802, %v803
        %v805 = vsub.s32 4294967266, %v800
        %v806 = vadd.s32 %v805, 127
        %v807 = vshll.u32 %v806, 23
        %v808 = vor.u32 4788187, %v807
        %v809 = vand.u32 2147483647, %v808
        %v811 = vcvt.s32.f32 %v804
        %v812 = vmul.f32 %v811, %v809
        %v813 = vxor.u32 %v812, 2147483648
        %v814 = vsel %vm731, %v813, %v812
        %v815 = vsub.s32 4, %v791
        %v816 = vsel %vm731, %v815, %v791
        %v817 = vsel %vm730, %v369, %v814
        %v818 = vsel %vm730, 0, %v816
        %v819 = vcosq.f32.pop %v817
        %v820 = vsinq.f32.pop %v817
        %vm821 = vweird.f32 %v369
        %v822 = vadd.s32 %v818, 3
        %v823 = vand.u32 %v822, 3
        %vm824 = vcmp.lt.s32.totalorder %v823, 2
        %vm825 = vcmp.eq.s32.totalorder %v823, 0
        %v826 = vxor.u32 %v820, 2147483648
        %v827 = vsel %vm825, %v819, %v826
        %vm828 = vcmp.eq.s32.totalorder %v823, 2
        %v829 = vxor.u32 %v819, 2147483648
        %v830 = vsel %vm828, %v829, %v820
        %v831 = vsel %vm824, %v827, %v830
        %v832 = vsel %vm821, nan, %v831
        %v833 = vand.u32 2147483647, %v374
        %vm834 = vcmp.le.f32.partialorder %v833, 0.7853982
        %vm835 = vcmp.lt.s32.totalorder %v374, 0
        %v836 = vand.u32 %v374, 2139095040
        %v837 = vshrl.u32 %v836, 23
        %v838 = vsub.s32 %v837, 127
        %v839 = vand.u32 2147483647, %v374
        %v840 = vand.u32 %v839, 8388607
        %v841 = vor.u32 %v840, 8388608
        %v842 = vsub.s32 0, %v841
        %v843 = vadd.s32 %v838, 1
        %vm844 = vcmp.gt.s32.totalorder %v843, 0
        %v845 = vsel %vm844, %v843, 0
        %v846 = vshrl.u32 %v845, 5
        %v847 = vand.u32 %v845, 31
        %v848 = vsub.s32 32, %v847
        %v849 = vshrl.u32 683565275, %v848
        %v850 = vshll.u32 683565275, %v847
        %v851 = vshrl.u32 2475754826, %v848
        %v852 = vor.u32 %v850, %v851
        %v853 = vshll.u32 2475754826, %v847
        %v854 = vshrl.u32 2131351028, %v848
        %v855 = vor.u32 %v853, %v854
        %v856 = vshll.u32 2131351028, %v847
        %v857 = vshrl.u32 2102212464, %v848
        %v858 = vor.u32 %v856, %v857
        %v859 = vshll.u32 2102212464, %v847
        %v860 = vshrl.u32 920167782, %v848
        %v861 = vor.u32 %v859, %v860
        %v862 = vshll.u32 920167782, %v847
        %v863 = vshrl.u32 1326507024, %v848
        %v864 = vor.u32 %v862, %v863
        %vm865 = vcmp.lt.s32.totalorder %v846, 1
        %vm866 = vcmp.lt.s32.totalorder %v846, 2
        %vm867 = vcmp.lt.s32.totalorder %v846, 3
        %vm868 = vcmp.lt.s32.totalorder %v846, 4
        %v869 = vsel %vm865, %v849, %v852
        %v870 = vsel %vm868, %v858, 2102212464
        %v871 = vsel %vm867, %v855, %v870
        %v872 = vsel %vm866, %v869, %v871
        %v873 = vsel %vm865, %v852, %v855
        %v874 = vsel %vm868, %v861, 920167782
        %v875 = vsel %vm867, %v858, %v874
        %v876 = vsel %vm866, %v873, %v875
        %v877 = vsel %vm865, %v855, %v858
        %v878 = vsel %vm868, %v864, 1326507024
        %v879 = vsel %vm867, %v861, %v878
        %v880 = vsel %vm866, %v877, %v879
        %v881 = vshll.u32 %v841, 8
        %v882 = vmul.u32.u64.compose %v881, %v880
        %v883 = vextract.low.u32 %v882
        %v884 = vextract.high.u32 %v882
        %v885 = vmul.u32.u64.compose %v881, %v876
        %v886 = vextract.low.u32 %v885
        %v887 = vextract.high.u32 %v885
        %v888 = vmul.u32 %v881, %v872
        %v889 = vadd.s32 %v884, %v886
        %vm890 = vc.u32 %v884, %v886
        %v891 = vadd.s32 %v887, 1
        %v892 = vsel %vm890, %v891, %v887
        %v893 = vadd.s32 %v888, %v892
        %v894 = vadd.s32 %v893, 536870912
        %v895 = vshrl.u32 %v894, 30
        %v896 = vshll.u32 %v895, 30
        %v897 = vsub.s32 %v893, %v896
        %vm898 = vcmp.lt.s32.totalorder %v897, 0
        %v899 = vsub.s32 0, %v897
        %v900 = vsel %vm898, %v899, %v897
        %v901 = vclz %v900
        %v902 = vsub.s32 %v901, 2
        %vm903 = vcmp.gt.s32.totalorder 0, %v902
        %v904 = vsel %vm903, 0, %v902
        %v905 = vsub.s32 32, %v904
        %v906 = vshll.u32 %v897, %v904
        %v907 = vshrl.u32 %v889, %v905
        %v908 = vor.u32 %v906, %v907
        %v909 = vsub.s32 4294967266, %v904
        %v910 = vadd.s32 %v909, 127
        %v911 = vshll.u32 %v910, 23
        %v912 = vor.u32 4788187, %v911
        %v913 = vand.u32 2147483647, %v912
        %v915 = vcvt.s32.f32 %v908
        %v916 = vmul.f32 %v915, %v913
        %v917 = vxor.u32 %v916, 2147483648
        %v918 = vsel %vm835, %v917, %v916
        %v919 = vsub.s32 4, %v895
        %v920 = vsel %vm835, %v919, %v895
        %v921 = vsel %vm834, %v374, %v918
        %v922 = vsel %vm834, 0, %v920
        %v923 = vcosq.f32.pop %v921
        %v924 = vsinq.f32.pop %v921
        %vm925 = vweird.f32 %v374
        %v926 = vadd.s32 %v922, 3
        %v927 = vand.u32 %v926, 3
        %vm928 = vcmp.lt.s32.totalorder %v927, 2
        %vm929 = vcmp.eq.s32.totalorder %v927, 0
        %v930 = vxor.u32 %v924, 2147483648
        %v931 = vsel %vm929, %v923, %v930
        %vm932 = vcmp.eq.s32.totalorder %v927, 2
        %v933 = vxor.u32 %v923, 2147483648
        %v934 = vsel %vm932, %v933, %v924
        %v935 = vsel %vm928, %v931, %v934
        %v936 = vsel %vm925, nan, %v935
        %v937 = vand.u32 2147483647, %v379
        %vm938 = vcmp.le.f32.partialorder %v937, 0.7853982
        %vm939 = vcmp.lt.s32.totalorder %v379, 0
        %v940 = vand.u32 %v379, 2139095040
        %v941 = vshrl.u32 %v940, 23
        %v942 = vsub.s32 %v941, 127
        %v943 = vand.u32 2147483647, %v379
        %v944 = vand.u32 %v943, 8388607
        %v945 = vor.u32 %v944, 8388608
        %v946 = vsub.s32 0, %v945
        %v947 = vadd.s32 %v942, 1
        %vm948 = vcmp.gt.s32.totalorder %v947, 0
        %v949 = vsel %vm948, %v947, 0
        %v950 = vshrl.u32 %v949, 5
        %v951 = vand.u32 %v949, 31
        %v952 = vsub.s32 32, %v951
        %v953 = vshrl.u32 683565275, %v952
        %v954 = vshll.u32 683565275, %v951
        %v955 = vshrl.u32 2475754826, %v952
        %v956 = vor.u32 %v954, %v955
        %v957 = vshll.u32 2475754826, %v951
        %v958 = vshrl.u32 2131351028, %v952
        %v959 = vor.u32 %v957, %v958
        %v960 = vshll.u32 2131351028, %v951
        %v961 = vshrl.u32 2102212464, %v952
        %v962 = vor.u32 %v960, %v961
        %v963 = vshll.u32 2102212464, %v951
        %v964 = vshrl.u32 920167782, %v952
        %v965 = vor.u32 %v963, %v964
        %v966 = vshll.u32 920167782, %v951
        %v967 = vshrl.u32 1326507024, %v952
        %v968 = vor.u32 %v966, %v967
        %vm969 = vcmp.lt.s32.totalorder %v950, 1
        %vm970 = vcmp.lt.s32.totalorder %v950, 2
        %vm971 = vcmp.lt.s32.totalorder %v950, 3
        %vm972 = vcmp.lt.s32.totalorder %v950, 4
        %v973 = vsel %vm969, %v953, %v956
        %v974 = vsel %vm972, %v962, 2102212464
        %v975 = vsel %vm971, %v959, %v974
        %v976 = vsel %vm970, %v973, %v975
        %v977 = vsel %vm969, %v956, %v959
        %v978 = vsel %vm972, %v965, 920167782
        %v979 = vsel %vm971, %v962, %v978
        %v980 = vsel %vm970, %v977, %v979
        %v981 = vsel %vm969, %v959, %v962
        %v982 = vsel %vm972, %v968, 1326507024
        %v983 = vsel %vm971, %v965, %v982
        %v984 = vsel %vm970, %v981, %v983
        %v985 = vshll.u32 %v945, 8
        %v986 = vmul.u32.u64.compose %v985, %v984
        %v987 = vextract.low.u32 %v986
        %v988 = vextract.high.u32 %v986
        %v989 = vmul.u32.u64.compose %v985, %v980
        %v990 = vextract.low.u32 %v989
        %v991 = vextract.high.u32 %v989
        %v992 = vmul.u32 %v985, %v976
        %v993 = vadd.s32 %v988, %v990
        %vm994 = vc.u32 %v988, %v990
        %v995 = vadd.s32 %v991, 1
        %v996 = vsel %vm994, %v995, %v991
        %v997 = vadd.s32 %v992, %v996
        %v998 = vadd.s32 %v997, 536870912
        %v999 = vshrl.u32 %v998, 30
        %v1000 = vshll.u32 %v999, 30
        %v1001 = vsub.s32 %v997, %v1000
        %vm1002 = vcmp.lt.s32.totalorder %v1001, 0
        %v1003 = vsub.s32 0, %v1001
        %v1004 = vsel %vm1002, %v1003, %v1001
        %v1005 = vclz %v1004
        %v1006 = vsub.s32 %v1005, 2
        %vm1007 = vcmp.gt.s32.totalorder 0, %v1006
        %v1008 = vsel %vm1007, 0, %v1006
        %v1009 = vsub.s32 32, %v1008
        %v1010 = vshll.u32 %v1001, %v1008
        %v1011 = vshrl.u32 %v993, %v1009
        %v1012 = vor.u32 %v1010, %v1011
        %v1013 = vsub.s32 4294967266, %v1008
        %v1014 = vadd.s32 %v1013, 127
        %v1015 = vshll.u32 %v1014, 23
        %v1016 = vor.u32 4788187, %v1015
        %v1017 = vand.u32 2147483647, %v1016
        %v1019 = vcvt.s32.f32 %v1012
        %v1020 = vmul.f32 %v1019, %v1017
        %v1021 = vxor.u32 %v1020, 2147483648
        %v1022 = vsel %vm939, %v1021, %v1020
        %v1023 = vsub.s32 4, %v999
        %v1024 = vsel %vm939, %v1023, %v999
        %v1025 = vsel %vm938, %v379, %v1022
        %v1026 = vsel %vm938, 0, %v1024
        %v1027 = vcosq.f32.pop %v1025
        %v1028 = vsinq.f32.pop %v1025
        %vm1029 = vweird.f32 %v379
        %v1030 = vadd.s32 %v1026, 3
        %v1031 = vand.u32 %v1030, 3
        %vm1032 = vcmp.lt.s32.totalorder %v1031, 2
        %vm1033 = vcmp.eq.s32.totalorder %v1031, 0
        %v1034 = vxor.u32 %v1028, 2147483648
        %v1035 = vsel %vm1033, %v1027, %v1034
        %vm1036 = vcmp.eq.s32.totalorder %v1031, 2
        %v1037 = vxor.u32 %v1027, 2147483648
        %v1038 = vsel %vm1036, %v1037, %v1028
        %v1039 = vsel %vm1032, %v1035, %v1038
        %v1040 = vsel %vm1029, nan, %v1039
        %v1041 = vand.u32 2147483647, %v384
        %vm1042 = vcmp.le.f32.partialorder %v1041, 0.7853982
        %vm1043 = vcmp.lt.s32.totalorder %v384, 0
        %v1044 = vand.u32 %v384, 2139095040
        %v1045 = vshrl.u32 %v1044, 23
        %v1046 = vsub.s32 %v1045, 127
        %v1047 = vand.u32 2147483647, %v384
        %v1048 = vand.u32 %v1047, 8388607
        %v1049 = vor.u32 %v1048, 8388608
        %v1050 = vsub.s32 0, %v1049
        %v1051 = vadd.s32 %v1046, 1
        %vm1052 = vcmp.gt.s32.totalorder %v1051, 0
        %v1053 = vsel %vm1052, %v1051, 0
        %v1054 = vshrl.u32 %v1053, 5
        %v1055 = vand.u32 %v1053, 31
        %v1056 = vsub.s32 32, %v1055
        %v1057 = vshrl.u32 683565275, %v1056
        %v1058 = vshll.u32 683565275, %v1055
        %v1059 = vshrl.u32 2475754826, %v1056
        %v1060 = vor.u32 %v1058, %v1059
        %v1061 = vshll.u32 2475754826, %v1055
        %v1062 = vshrl.u32 2131351028, %v1056
        %v1063 = vor.u32 %v1061, %v1062
        %v1064 = vshll.u32 2131351028, %v1055
        %v1065 = vshrl.u32 2102212464, %v1056
        %v1066 = vor.u32 %v1064, %v1065
        %v1067 = vshll.u32 2102212464, %v1055
        %v1068 = vshrl.u32 920167782, %v1056
        %v1069 = vor.u32 %v1067, %v1068
        %v1070 = vshll.u32 920167782, %v1055
        %v1071 = vshrl.u32 1326507024, %v1056
        %v1072 = vor.u32 %v1070, %v1071
        %vm1073 = vcmp.lt.s32.totalorder %v1054, 1
        %vm1074 = vcmp.lt.s32.totalorder %v1054, 2
        %vm1075 = vcmp.lt.s32.totalorder %v1054, 3
        %vm1076 = vcmp.lt.s32.totalorder %v1054, 4
        %v1077 = vsel %vm1073, %v1057, %v1060
        %v1078 = vsel %vm1076, %v1066, 2102212464
        %v1079 = vsel %vm1075, %v1063, %v1078
        %v1080 = vsel %vm1074, %v1077, %v1079
        %v1081 = vsel %vm1073, %v1060, %v1063
        %v1082 = vsel %vm1076, %v1069, 920167782
        %v1083 = vsel %vm1075, %v1066, %v1082
        %v1084 = vsel %vm1074, %v1081, %v1083
        %v1085 = vsel %vm1073, %v1063, %v1066
        %v1086 = vsel %vm1076, %v1072, 1326507024
        %v1087 = vsel %vm1075, %v1069, %v1086
        %v1088 = vsel %vm1074, %v1085, %v1087
        %v1089 = vshll.u32 %v1049, 8
        %v1090 = vmul.u32.u64.compose %v1089, %v1088
        %v1091 = vextract.low.u32 %v1090
        %v1092 = vextract.high.u32 %v1090
        %v1093 = vmul.u32.u64.compose %v1089, %v1084
        %v1094 = vextract.low.u32 %v1093
        %v1095 = vextract.high.u32 %v1093
        %v1096 = vmul.u32 %v1089, %v1080
        %v1097 = vadd.s32 %v1092, %v1094
        %vm1098 = vc.u32 %v1092, %v1094
        %v1099 = vadd.s32 %v1095, 1
        %v1100 = vsel %vm1098, %v1099, %v1095
        %v1101 = vadd.s32 %v1096, %v1100
        %v1102 = vadd.s32 %v1101, 536870912
        %v1103 = vshrl.u32 %v1102, 30
        %v1104 = vshll.u32 %v1103, 30
        %v1105 = vsub.s32 %v1101, %v1104
        %vm1106 = vcmp.lt.s32.totalorder %v1105, 0
        %v1107 = vsub.s32 0, %v1105
        %v1108 = vsel %vm1106, %v1107, %v1105
        %v1109 = vclz %v1108
        %v1110 = vsub.s32 %v1109, 2
        %vm1111 = vcmp.gt.s32.totalorder 0, %v1110
        %v1112 = vsel %vm1111, 0, %v1110
        %v1113 = vsub.s32 32, %v1112
        %v1114 = vshll.u32 %v1105, %v1112
        %v1115 = vshrl.u32 %v1097, %v1113
        %v1116 = vor.u32 %v1114, %v1115
        %v1117 = vsub.s32 4294967266, %v1112
        %v1118 = vadd.s32 %v1117, 127
        %v1119 = vshll.u32 %v1118, 23
        %v1120 = vor.u32 4788187, %v1119
        %v1121 = vand.u32 2147483647, %v1120
        %v1123 = vcvt.s32.f32 %v1116
        %v1124 = vmul.f32 %v1123, %v1121
        %v1125 = vxor.u32 %v1124, 2147483648
        %v1126 = vsel %vm1043, %v1125, %v1124
        %v1127 = vsub.s32 4, %v1103
        %v1128 = vsel %vm1043, %v1127, %v1103
        %v1129 = vsel %vm1042, %v384, %v1126
        %v1130 = vsel %vm1042, 0, %v1128
        %v1131 = vcosq.f32.pop %v1129
        %v1132 = vsinq.f32.pop %v1129
        %vm1133 = vweird.f32 %v384
        %v1134 = vadd.s32 %v1130, 3
        %v1135 = vand.u32 %v1134, 3
        %vm1136 = vcmp.lt.s32.totalorder %v1135, 2
        %vm1137 = vcmp.eq.s32.totalorder %v1135, 0
        %v1138 = vxor.u32 %v1132, 2147483648
        %v1139 = vsel %vm1137, %v1131, %v1138
        %vm1140 = vcmp.eq.s32.totalorder %v1135, 2
        %v1141 = vxor.u32 %v1131, 2147483648
        %v1142 = vsel %vm1140, %v1141, %v1132
        %v1143 = vsel %vm1136, %v1139, %v1142
        %v1144 = vsel %vm1133, nan, %v1143
        %v1145 = vand.u32 2147483647, %v389
        %vm1146 = vcmp.le.f32.partialorder %v1145, 0.7853982
        %vm1147 = vcmp.lt.s32.totalorder %v389, 0
        %v1148 = vand.u32 %v389, 2139095040
        %v1149 = vshrl.u32 %v1148, 23
        %v1150 = vsub.s32 %v1149, 127
        %v1151 = vand.u32 2147483647, %v389
        %v1152 = vand.u32 %v1151, 8388607
        %v1153 = vor.u32 %v1152, 8388608
        %v1154 = vsub.s32 0, %v1153
        %v1155 = vadd.s32 %v1150, 1
        %vm1156 = vcmp.gt.s32.totalorder %v1155, 0
        %v1157 = vsel %vm1156, %v1155, 0
        %v1158 = vshrl.u32 %v1157, 5
        %v1159 = vand.u32 %v1157, 31
        %v1160 = vsub.s32 32, %v1159
        %v1161 = vshrl.u32 683565275, %v1160
        %v1162 = vshll.u32 683565275, %v1159
        %v1163 = vshrl.u32 2475754826, %v1160
        %v1164 = vor.u32 %v1162, %v1163
        %v1165 = vshll.u32 2475754826, %v1159
        %v1166 = vshrl.u32 2131351028, %v1160
        %v1167 = vor.u32 %v1165, %v1166
        %v1168 = vshll.u32 2131351028, %v1159
        %v1169 = vshrl.u32 2102212464, %v1160
        %v1170 = vor.u32 %v1168, %v1169
        %v1171 = vshll.u32 2102212464, %v1159
        %v1172 = vshrl.u32 920167782, %v1160
        %v1173 = vor.u32 %v1171, %v1172
        %v1174 = vshll.u32 920167782, %v1159
        %v1175 = vshrl.u32 1326507024, %v1160
        %v1176 = vor.u32 %v1174, %v1175
        %vm1177 = vcmp.lt.s32.totalorder %v1158, 1
        %vm1178 = vcmp.lt.s32.totalorder %v1158, 2
        %vm1179 = vcmp.lt.s32.totalorder %v1158, 3
        %vm1180 = vcmp.lt.s32.totalorder %v1158, 4
        %v1181 = vsel %vm1177, %v1161, %v1164
        %v1182 = vsel %vm1180, %v1170, 2102212464
        %v1183 = vsel %vm1179, %v1167, %v1182
        %v1184 = vsel %vm1178, %v1181, %v1183
        %v1185 = vsel %vm1177, %v1164, %v1167
        %v1186 = vsel %vm1180, %v1173, 920167782
        %v1187 = vsel %vm1179, %v1170, %v1186
        %v1188 = vsel %vm1178, %v1185, %v1187
        %v1189 = vsel %vm1177, %v1167, %v1170
        %v1190 = vsel %vm1180, %v1176, 1326507024
        %v1191 = vsel %vm1179, %v1173, %v1190
        %v1192 = vsel %vm1178, %v1189, %v1191
        %v1193 = vshll.u32 %v1153, 8
        %v1194 = vmul.u32.u64.compose %v1193, %v1192
        %v1195 = vextract.low.u32 %v1194
        %v1196 = vextract.high.u32 %v1194
        %v1197 = vmul.u32.u64.compose %v1193, %v1188
        %v1198 = vextract.low.u32 %v1197
        %v1199 = vextract.high.u32 %v1197
        %v1200 = vmul.u32 %v1193, %v1184
        %v1201 = vadd.s32 %v1196, %v1198
        %vm1202 = vc.u32 %v1196, %v1198
        %v1203 = vadd.s32 %v1199, 1
        %v1204 = vsel %vm1202, %v1203, %v1199
        %v1205 = vadd.s32 %v1200, %v1204
        %v1206 = vadd.s32 %v1205, 536870912
        %v1207 = vshrl.u32 %v1206, 30
        %v1208 = vshll.u32 %v1207, 30
        %v1209 = vsub.s32 %v1205, %v1208
        %vm1210 = vcmp.lt.s32.totalorder %v1209, 0
        %v1211 = vsub.s32 0, %v1209
        %v1212 = vsel %vm1210, %v1211, %v1209
        %v1213 = vclz %v1212
        %v1214 = vsub.s32 %v1213, 2
        %vm1215 = vcmp.gt.s32.totalorder 0, %v1214
        %v1216 = vsel %vm1215, 0, %v1214
        %v1217 = vsub.s32 32, %v1216
        %v1218 = vshll.u32 %v1209, %v1216
        %v1219 = vshrl.u32 %v1201, %v1217
        %v1220 = vor.u32 %v1218, %v1219
        %v1221 = vsub.s32 4294967266, %v1216
        %v1222 = vadd.s32 %v1221, 127
        %v1223 = vshll.u32 %v1222, 23
        %v1224 = vor.u32 4788187, %v1223
        %v1225 = vand.u32 2147483647, %v1224
        %v1227 = vcvt.s32.f32 %v1220
        %v1228 = vmul.f32 %v1227, %v1225
        %v1229 = vxor.u32 %v1228, 2147483648
        %v1230 = vsel %vm1147, %v1229, %v1228
        %v1231 = vsub.s32 4, %v1207
        %v1232 = vsel %vm1147, %v1231, %v1207
        %v1233 = vsel %vm1146, %v389, %v1230
        %v1234 = vsel %vm1146, 0, %v1232
        %v1235 = vcosq.f32.pop %v1233
        %v1236 = vsinq.f32.pop %v1233
        %vm1237 = vweird.f32 %v389
        %v1238 = vadd.s32 %v1234, 3
        %v1239 = vand.u32 %v1238, 3
        %vm1240 = vcmp.lt.s32.totalorder %v1239, 2
        %vm1241 = vcmp.eq.s32.totalorder %v1239, 0
        %v1242 = vxor.u32 %v1236, 2147483648
        %v1243 = vsel %vm1241, %v1235, %v1242
        %vm1244 = vcmp.eq.s32.totalorder %v1239, 2
        %v1245 = vxor.u32 %v1235, 2147483648
        %v1246 = vsel %vm1244, %v1245, %v1236
        %v1247 = vsel %vm1240, %v1243, %v1246
        %v1248 = vsel %vm1237, nan, %v1247
        %v1249 = vand.u32 2147483647, %v394
        %vm1250 = vcmp.le.f32.partialorder %v1249, 0.7853982
        %vm1251 = vcmp.lt.s32.totalorder %v394, 0
        %v1252 = vand.u32 %v394, 2139095040
        %v1253 = vshrl.u32 %v1252, 23
        %v1254 = vsub.s32 %v1253, 127
        %v1255 = vand.u32 2147483647, %v394
        %v1256 = vand.u32 %v1255, 8388607
        %v1257 = vor.u32 %v1256, 8388608
        %v1258 = vsub.s32 0, %v1257
        %v1259 = vadd.s32 %v1254, 1
        %vm1260 = vcmp.gt.s32.totalorder %v1259, 0
        %v1261 = vsel %vm1260, %v1259, 0
        %v1262 = vshrl.u32 %v1261, 5
        %v1263 = vand.u32 %v1261, 31
        %v1264 = vsub.s32 32, %v1263
        %v1265 = vshrl.u32 683565275, %v1264
        %v1266 = vshll.u32 683565275, %v1263
        %v1267 = vshrl.u32 2475754826, %v1264
        %v1268 = vor.u32 %v1266, %v1267
        %v1269 = vshll.u32 2475754826, %v1263
        %v1270 = vshrl.u32 2131351028, %v1264
        %v1271 = vor.u32 %v1269, %v1270
        %v1272 = vshll.u32 2131351028, %v1263
        %v1273 = vshrl.u32 2102212464, %v1264
        %v1274 = vor.u32 %v1272, %v1273
        %v1275 = vshll.u32 2102212464, %v1263
        %v1276 = vshrl.u32 920167782, %v1264
        %v1277 = vor.u32 %v1275, %v1276
        %v1278 = vshll.u32 920167782, %v1263
        %v1279 = vshrl.u32 1326507024, %v1264
        %v1280 = vor.u32 %v1278, %v1279
        %vm1281 = vcmp.lt.s32.totalorder %v1262, 1
        %vm1282 = vcmp.lt.s32.totalorder %v1262, 2
        %vm1283 = vcmp.lt.s32.totalorder %v1262, 3
        %vm1284 = vcmp.lt.s32.totalorder %v1262, 4
        %v1285 = vsel %vm1281, %v1265, %v1268
        %v1286 = vsel %vm1284, %v1274, 2102212464
        %v1287 = vsel %vm1283, %v1271, %v1286
        %v1288 = vsel %vm1282, %v1285, %v1287
        %v1289 = vsel %vm1281, %v1268, %v1271
        %v1290 = vsel %vm1284, %v1277, 920167782
        %v1291 = vsel %vm1283, %v1274, %v1290
        %v1292 = vsel %vm1282, %v1289, %v1291
        %v1293 = vsel %vm1281, %v1271, %v1274
        %v1294 = vsel %vm1284, %v1280, 1326507024
        %v1295 = vsel %vm1283, %v1277, %v1294
        %v1296 = vsel %vm1282, %v1293, %v1295
        %v1297 = vshll.u32 %v1257, 8
        %v1298 = vmul.u32.u64.compose %v1297, %v1296
        %v1299 = vextract.low.u32 %v1298
        %v1300 = vextract.high.u32 %v1298
        %v1301 = vmul.u32.u64.compose %v1297, %v1292
        %v1302 = vextract.low.u32 %v1301
        %v1303 = vextract.high.u32 %v1301
        %v1304 = vmul.u32 %v1297, %v1288
        %v1305 = vadd.s32 %v1300, %v1302
        %vm1306 = vc.u32 %v1300, %v1302
        %v1307 = vadd.s32 %v1303, 1
        %v1308 = vsel %vm1306, %v1307, %v1303
        %v1309 = vadd.s32 %v1304, %v1308
        %v1310 = vadd.s32 %v1309, 536870912
        %v1311 = vshrl.u32 %v1310, 30
        %v1312 = vshll.u32 %v1311, 30
        %v1313 = vsub.s32 %v1309, %v1312
        %vm1314 = vcmp.lt.s32.totalorder %v1313, 0
        %v1315 = vsub.s32 0, %v1313
        %v1316 = vsel %vm1314, %v1315, %v1313
        %v1317 = vclz %v1316
        %v1318 = vsub.s32 %v1317, 2
        %vm1319 = vcmp.gt.s32.totalorder 0, %v1318
        %v1320 = vsel %vm1319, 0, %v1318
        %v1321 = vsub.s32 32, %v1320
        %v1322 = vshll.u32 %v1313, %v1320
        %v1323 = vshrl.u32 %v1305, %v1321
        %v1324 = vor.u32 %v1322, %v1323
        %v1325 = vsub.s32 4294967266, %v1320
        %v1326 = vadd.s32 %v1325, 127
        %v1327 = vshll.u32 %v1326, 23
        %v1328 = vor.u32 4788187, %v1327
        %v1329 = vand.u32 2147483647, %v1328
        %v1331 = vcvt.s32.f32 %v1324
        %v1332 = vmul.f32 %v1331, %v1329
        %v1333 = vxor.u32 %v1332, 2147483648
        %v1334 = vsel %vm1251, %v1333, %v1332
        %v1335 = vsub.s32 4, %v1311
        %v1336 = vsel %vm1251, %v1335, %v1311
        %v1337 = vsel %vm1250, %v394, %v1334
        %v1338 = vsel %vm1250, 0, %v1336
        %v1339 = vcosq.f32.pop %v1337
        %v1340 = vsinq.f32.pop %v1337
        %vm1341 = vweird.f32 %v394
        %v1342 = vadd.s32 %v1338, 3
        %v1343 = vand.u32 %v1342, 3
        %vm1344 = vcmp.lt.s32.totalorder %v1343, 2
        %vm1345 = vcmp.eq.s32.totalorder %v1343, 0
        %v1346 = vxor.u32 %v1340, 2147483648
        %v1347 = vsel %vm1345, %v1339, %v1346
        %vm1348 = vcmp.eq.s32.totalorder %v1343, 2
        %v1349 = vxor.u32 %v1339, 2147483648
        %v1350 = vsel %vm1348, %v1349, %v1340
        %v1351 = vsel %vm1344, %v1347, %v1350
        %v1352 = vsel %vm1341, nan, %v1351
        %v1353 = vand.u32 2147483647, %v399
        %vm1354 = vcmp.le.f32.partialorder %v1353, 0.7853982
        %vm1355 = vcmp.lt.s32.totalorder %v399, 0
        %v1356 = vand.u32 %v399, 2139095040
        %v1357 = vshrl.u32 %v1356, 23
        %v1358 = vsub.s32 %v1357, 127
        %v1359 = vand.u32 2147483647, %v399
        %v1360 = vand.u32 %v1359, 8388607
        %v1361 = vor.u32 %v1360, 8388608
        %v1362 = vsub.s32 0, %v1361
        %v1363 = vadd.s32 %v1358, 1
        %vm1364 = vcmp.gt.s32.totalorder %v1363, 0
        %v1365 = vsel %vm1364, %v1363, 0
        %v1366 = vshrl.u32 %v1365, 5
        %v1367 = vand.u32 %v1365, 31
        %v1368 = vsub.s32 32, %v1367
        %v1369 = vshrl.u32 683565275, %v1368
        %v1370 = vshll.u32 683565275, %v1367
        %v1371 = vshrl.u32 2475754826, %v1368
        %v1372 = vor.u32 %v1370, %v1371
        %v1373 = vshll.u32 2475754826, %v1367
        %v1374 = vshrl.u32 2131351028, %v1368
        %v1375 = vor.u32 %v1373, %v1374
        %v1376 = vshll.u32 2131351028, %v1367
        %v1377 = vshrl.u32 2102212464, %v1368
        %v1378 = vor.u32 %v1376, %v1377
        %v1379 = vshll.u32 2102212464, %v1367
        %v1380 = vshrl.u32 920167782, %v1368
        %v1381 = vor.u32 %v1379, %v1380
        %v1382 = vshll.u32 920167782, %v1367
        %v1383 = vshrl.u32 1326507024, %v1368
        %v1384 = vor.u32 %v1382, %v1383
        %vm1385 = vcmp.lt.s32.totalorder %v1366, 1
        %vm1386 = vcmp.lt.s32.totalorder %v1366, 2
        %vm1387 = vcmp.lt.s32.totalorder %v1366, 3
        %vm1388 = vcmp.lt.s32.totalorder %v1366, 4
        %v1389 = vsel %vm1385, %v1369, %v1372
        %v1390 = vsel %vm1388, %v1378, 2102212464
        %v1391 = vsel %vm1387, %v1375, %v1390
        %v1392 = vsel %vm1386, %v1389, %v1391
        %v1393 = vsel %vm1385, %v1372, %v1375
        %v1394 = vsel %vm1388, %v1381, 920167782
        %v1395 = vsel %vm1387, %v1378, %v1394
        %v1396 = vsel %vm1386, %v1393, %v1395
        %v1397 = vsel %vm1385, %v1375, %v1378
        %v1398 = vsel %vm1388, %v1384, 1326507024
        %v1399 = vsel %vm1387, %v1381, %v1398
        %v1400 = vsel %vm1386, %v1397, %v1399
        %v1401 = vshll.u32 %v1361, 8
        %v1402 = vmul.u32.u64.compose %v1401, %v1400
        %v1403 = vextract.low.u32 %v1402
        %v1404 = vextract.high.u32 %v1402
        %v1405 = vmul.u32.u64.compose %v1401, %v1396
        %v1406 = vextract.low.u32 %v1405
        %v1407 = vextract.high.u32 %v1405
        %v1408 = vmul.u32 %v1401, %v1392
        %v1409 = vadd.s32 %v1404, %v1406
        %vm1410 = vc.u32 %v1404, %v1406
        %v1411 = vadd.s32 %v1407, 1
        %v1412 = vsel %vm1410, %v1411, %v1407
        %v1413 = vadd.s32 %v1408, %v1412
        %v1414 = vadd.s32 %v1413, 536870912
        %v1415 = vshrl.u32 %v1414, 30
        %v1416 = vshll.u32 %v1415, 30
        %v1417 = vsub.s32 %v1413, %v1416
        %vm1418 = vcmp.lt.s32.totalorder %v1417, 0
        %v1419 = vsub.s32 0, %v1417
        %v1420 = vsel %vm1418, %v1419, %v1417
        %v1421 = vclz %v1420
        %v1422 = vsub.s32 %v1421, 2
        %vm1423 = vcmp.gt.s32.totalorder 0, %v1422
        %v1424 = vsel %vm1423, 0, %v1422
        %v1425 = vsub.s32 32, %v1424
        %v1426 = vshll.u32 %v1417, %v1424
        %v1427 = vshrl.u32 %v1409, %v1425
        %v1428 = vor.u32 %v1426, %v1427
        %v1429 = vsub.s32 4294967266, %v1424
        %v1430 = vadd.s32 %v1429, 127
        %v1431 = vshll.u32 %v1430, 23
        %v1432 = vor.u32 4788187, %v1431
        %v1433 = vand.u32 2147483647, %v1432
        %v1435 = vcvt.s32.f32 %v1428
        %v1436 = vmul.f32 %v1435, %v1433
        %v1437 = vxor.u32 %v1436, 2147483648
        %v1438 = vsel %vm1355, %v1437, %v1436
        %v1439 = vsub.s32 4, %v1415
        %v1440 = vsel %vm1355, %v1439, %v1415
        %v1441 = vsel %vm1354, %v399, %v1438
        %v1442 = vsel %vm1354, 0, %v1440
        %v1443 = vcosq.f32.pop %v1441
        %v1444 = vsinq.f32.pop %v1441
        %vm1445 = vweird.f32 %v399
        %v1446 = vadd.s32 %v1442, 3
        %v1447 = vand.u32 %v1446, 3
        %vm1448 = vcmp.lt.s32.totalorder %v1447, 2
        %vm1449 = vcmp.eq.s32.totalorder %v1447, 0
        %v1450 = vxor.u32 %v1444, 2147483648
        %v1451 = vsel %vm1449, %v1443, %v1450
        %vm1452 = vcmp.eq.s32.totalorder %v1447, 2
        %v1453 = vxor.u32 %v1443, 2147483648
        %v1454 = vsel %vm1452, %v1453, %v1444
        %v1455 = vsel %vm1448, %v1451, %v1454
        %v1456 = vsel %vm1445, nan, %v1455
        %v1457 = vand.u32 2147483647, %v404
        %vm1458 = vcmp.le.f32.partialorder %v1457, 0.7853982
        %vm1459 = vcmp.lt.s32.totalorder %v404, 0
        %v1460 = vand.u32 %v404, 2139095040
        %v1461 = vshrl.u32 %v1460, 23
        %v1462 = vsub.s32 %v1461, 127
        %v1463 = vand.u32 2147483647, %v404
        %v1464 = vand.u32 %v1463, 8388607
        %v1465 = vor.u32 %v1464, 8388608
        %v1466 = vsub.s32 0, %v1465
        %v1467 = vadd.s32 %v1462, 1
        %vm1468 = vcmp.gt.s32.totalorder %v1467, 0
        %v1469 = vsel %vm1468, %v1467, 0
        %v1470 = vshrl.u32 %v1469, 5
        %v1471 = vand.u32 %v1469, 31
        %v1472 = vsub.s32 32, %v1471
        %v1473 = vshrl.u32 683565275, %v1472
        %v1474 = vshll.u32 683565275, %v1471
        %v1475 = vshrl.u32 2475754826, %v1472
        %v1476 = vor.u32 %v1474, %v1475
        %v1477 = vshll.u32 2475754826, %v1471
        %v1478 = vshrl.u32 2131351028, %v1472
        %v1479 = vor.u32 %v1477, %v1478
        %v1480 = vshll.u32 2131351028, %v1471
        %v1481 = vshrl.u32 2102212464, %v1472
        %v1482 = vor.u32 %v1480, %v1481
        %v1483 = vshll.u32 2102212464, %v1471
        %v1484 = vshrl.u32 920167782, %v1472
        %v1485 = vor.u32 %v1483, %v1484
        %v1486 = vshll.u32 920167782, %v1471
        %v1487 = vshrl.u32 1326507024, %v1472
        %v1488 = vor.u32 %v1486, %v1487
        %vm1489 = vcmp.lt.s32.totalorder %v1470, 1
        %vm1490 = vcmp.lt.s32.totalorder %v1470, 2
        %vm1491 = vcmp.lt.s32.totalorder %v1470, 3
        %vm1492 = vcmp.lt.s32.totalorder %v1470, 4
        %v1493 = vsel %vm1489, %v1473, %v1476
        %v1494 = vsel %vm1492, %v1482, 2102212464
        %v1495 = vsel %vm1491, %v1479, %v1494
        %v1496 = vsel %vm1490, %v1493, %v1495
        %v1497 = vsel %vm1489, %v1476, %v1479
        %v1498 = vsel %vm1492, %v1485, 920167782
        %v1499 = vsel %vm1491, %v1482, %v1498
        %v1500 = vsel %vm1490, %v1497, %v1499
        %v1501 = vsel %vm1489, %v1479, %v1482
        %v1502 = vsel %vm1492, %v1488, 1326507024
        %v1503 = vsel %vm1491, %v1485, %v1502
        %v1504 = vsel %vm1490, %v1501, %v1503
        %v1505 = vshll.u32 %v1465, 8
        %v1506 = vmul.u32.u64.compose %v1505, %v1504
        %v1507 = vextract.low.u32 %v1506
        %v1508 = vextract.high.u32 %v1506
        %v1509 = vmul.u32.u64.compose %v1505, %v1500
        %v1510 = vextract.low.u32 %v1509
        %v1511 = vextract.high.u32 %v1509
        %v1512 = vmul.u32 %v1505, %v1496
        %v1513 = vadd.s32 %v1508, %v1510
        %vm1514 = vc.u32 %v1508, %v1510
        %v1515 = vadd.s32 %v1511, 1
        %v1516 = vsel %vm1514, %v1515, %v1511
        %v1517 = vadd.s32 %v1512, %v1516
        %v1518 = vadd.s32 %v1517, 536870912
        %v1519 = vshrl.u32 %v1518, 30
        %v1520 = vshll.u32 %v1519, 30
        %v1521 = vsub.s32 %v1517, %v1520
        %vm1522 = vcmp.lt.s32.totalorder %v1521, 0
        %v1523 = vsub.s32 0, %v1521
        %v1524 = vsel %vm1522, %v1523, %v1521
        %v1525 = vclz %v1524
        %v1526 = vsub.s32 %v1525, 2
        %vm1527 = vcmp.gt.s32.totalorder 0, %v1526
        %v1528 = vsel %vm1527, 0, %v1526
        %v1529 = vsub.s32 32, %v1528
        %v1530 = vshll.u32 %v1521, %v1528
        %v1531 = vshrl.u32 %v1513, %v1529
        %v1532 = vor.u32 %v1530, %v1531
        %v1533 = vsub.s32 4294967266, %v1528
        %v1534 = vadd.s32 %v1533, 127
        %v1535 = vshll.u32 %v1534, 23
        %v1536 = vor.u32 4788187, %v1535
        %v1537 = vand.u32 2147483647, %v1536
        %v1539 = vcvt.s32.f32 %v1532
        %v1540 = vmul.f32 %v1539, %v1537
        %v1541 = vxor.u32 %v1540, 2147483648
        %v1542 = vsel %vm1459, %v1541, %v1540
        %v1543 = vsub.s32 4, %v1519
        %v1544 = vsel %vm1459, %v1543, %v1519
        %v1545 = vsel %vm1458, %v404, %v1542
        %v1546 = vsel %vm1458, 0, %v1544
        %v1547 = vcosq.f32.pop %v1545
        %v1548 = vsinq.f32.pop %v1545
        %vm1549 = vweird.f32 %v404
        %v1550 = vadd.s32 %v1546, 3
        %v1551 = vand.u32 %v1550, 3
        %vm1552 = vcmp.lt.s32.totalorder %v1551, 2
        %vm1553 = vcmp.eq.s32.totalorder %v1551, 0
        %v1554 = vxor.u32 %v1548, 2147483648
        %v1555 = vsel %vm1553, %v1547, %v1554
        %vm1556 = vcmp.eq.s32.totalorder %v1551, 2
        %v1557 = vxor.u32 %v1547, 2147483648
        %v1558 = vsel %vm1556, %v1557, %v1548
        %v1559 = vsel %vm1552, %v1555, %v1558
        %v1560 = vsel %vm1549, nan, %v1559
        %v1561 = vand.u32 2147483647, %v409
        %vm1562 = vcmp.le.f32.partialorder %v1561, 0.7853982
        %vm1563 = vcmp.lt.s32.totalorder %v409, 0
        %v1564 = vand.u32 %v409, 2139095040
        %v1565 = vshrl.u32 %v1564, 23
        %v1566 = vsub.s32 %v1565, 127
        %v1567 = vand.u32 2147483647, %v409
        %v1568 = vand.u32 %v1567, 8388607
        %v1569 = vor.u32 %v1568, 8388608
        %v1570 = vsub.s32 0, %v1569
        %v1571 = vadd.s32 %v1566, 1
        %vm1572 = vcmp.gt.s32.totalorder %v1571, 0
        %v1573 = vsel %vm1572, %v1571, 0
        %v1574 = vshrl.u32 %v1573, 5
        %v1575 = vand.u32 %v1573, 31
        %v1576 = vsub.s32 32, %v1575
        %v1577 = vshrl.u32 683565275, %v1576
        %v1578 = vshll.u32 683565275, %v1575
        %v1579 = vshrl.u32 2475754826, %v1576
        %v1580 = vor.u32 %v1578, %v1579
        %v1581 = vshll.u32 2475754826, %v1575
        %v1582 = vshrl.u32 2131351028, %v1576
        %v1583 = vor.u32 %v1581, %v1582
        %v1584 = vshll.u32 2131351028, %v1575
        %v1585 = vshrl.u32 2102212464, %v1576
        %v1586 = vor.u32 %v1584, %v1585
        %v1587 = vshll.u32 2102212464, %v1575
        %v1588 = vshrl.u32 920167782, %v1576
        %v1589 = vor.u32 %v1587, %v1588
        %v1590 = vshll.u32 920167782, %v1575
        %v1591 = vshrl.u32 1326507024, %v1576
        %v1592 = vor.u32 %v1590, %v1591
        %vm1593 = vcmp.lt.s32.totalorder %v1574, 1
        %vm1594 = vcmp.lt.s32.totalorder %v1574, 2
        %vm1595 = vcmp.lt.s32.totalorder %v1574, 3
        %vm1596 = vcmp.lt.s32.totalorder %v1574, 4
        %v1597 = vsel %vm1593, %v1577, %v1580
        %v1598 = vsel %vm1596, %v1586, 2102212464
        %v1599 = vsel %vm1595, %v1583, %v1598
        %v1600 = vsel %vm1594, %v1597, %v1599
        %v1601 = vsel %vm1593, %v1580, %v1583
        %v1602 = vsel %vm1596, %v1589, 920167782
        %v1603 = vsel %vm1595, %v1586, %v1602
        %v1604 = vsel %vm1594, %v1601, %v1603
        %v1605 = vsel %vm1593, %v1583, %v1586
        %v1606 = vsel %vm1596, %v1592, 1326507024
        %v1607 = vsel %vm1595, %v1589, %v1606
        %v1608 = vsel %vm1594, %v1605, %v1607
        %v1609 = vshll.u32 %v1569, 8
        %v1610 = vmul.u32.u64.compose %v1609, %v1608
        %v1611 = vextract.low.u32 %v1610
        %v1612 = vextract.high.u32 %v1610
        %v1613 = vmul.u32.u64.compose %v1609, %v1604
        %v1614 = vextract.low.u32 %v1613
        %v1615 = vextract.high.u32 %v1613
        %v1616 = vmul.u32 %v1609, %v1600
        %v1617 = vadd.s32 %v1612, %v1614
        %vm1618 = vc.u32 %v1612, %v1614
        %v1619 = vadd.s32 %v1615, 1
        %v1620 = vsel %vm1618, %v1619, %v1615
        %v1621 = vadd.s32 %v1616, %v1620
        %v1622 = vadd.s32 %v1621, 536870912
        %v1623 = vshrl.u32 %v1622, 30
        %v1624 = vshll.u32 %v1623, 30
        %v1625 = vsub.s32 %v1621, %v1624
        %vm1626 = vcmp.lt.s32.totalorder %v1625, 0
        %v1627 = vsub.s32 0, %v1625
        %v1628 = vsel %vm1626, %v1627, %v1625
        %v1629 = vclz %v1628
        %v1630 = vsub.s32 %v1629, 2
        %vm1631 = vcmp.gt.s32.totalorder 0, %v1630
        %v1632 = vsel %vm1631, 0, %v1630
        %v1633 = vsub.s32 32, %v1632
        %v1634 = vshll.u32 %v1625, %v1632
        %v1635 = vshrl.u32 %v1617, %v1633
        %v1636 = vor.u32 %v1634, %v1635
        %v1637 = vsub.s32 4294967266, %v1632
        %v1638 = vadd.s32 %v1637, 127
        %v1639 = vshll.u32 %v1638, 23
        %v1640 = vor.u32 4788187, %v1639
        %v1641 = vand.u32 2147483647, %v1640
        %v1643 = vcvt.s32.f32 %v1636
        %v1644 = vmul.f32 %v1643, %v1641
        %v1645 = vxor.u32 %v1644, 2147483648
        %v1646 = vsel %vm1563, %v1645, %v1644
        %v1647 = vsub.s32 4, %v1623
        %v1648 = vsel %vm1563, %v1647, %v1623
        %v1649 = vsel %vm1562, %v409, %v1646
        %v1650 = vsel %vm1562, 0, %v1648
        %v1651 = vcosq.f32.pop %v1649
        %v1652 = vsinq.f32.pop %v1649
        %vm1653 = vweird.f32 %v409
        %v1654 = vadd.s32 %v1650, 3
        %v1655 = vand.u32 %v1654, 3
        %vm1656 = vcmp.lt.s32.totalorder %v1655, 2
        %vm1657 = vcmp.eq.s32.totalorder %v1655, 0
        %v1658 = vxor.u32 %v1652, 2147483648
        %v1659 = vsel %vm1657, %v1651, %v1658
        %vm1660 = vcmp.eq.s32.totalorder %v1655, 2
        %v1661 = vxor.u32 %v1651, 2147483648
        %v1662 = vsel %vm1660, %v1661, %v1652
        %v1663 = vsel %vm1656, %v1659, %v1662
        %v1664 = vsel %vm1653, nan, %v1663
        %v1665 = vand.u32 2147483647, %v414
        %vm1666 = vcmp.le.f32.partialorder %v1665, 0.7853982
        %vm1667 = vcmp.lt.s32.totalorder %v414, 0
        %v1668 = vand.u32 %v414, 2139095040
        %v1669 = vshrl.u32 %v1668, 23
        %v1670 = vsub.s32 %v1669, 127
        %v1671 = vand.u32 2147483647, %v414
        %v1672 = vand.u32 %v1671, 8388607
        %v1673 = vor.u32 %v1672, 8388608
        %v1674 = vsub.s32 0, %v1673
        %v1675 = vadd.s32 %v1670, 1
        %vm1676 = vcmp.gt.s32.totalorder %v1675, 0
        %v1677 = vsel %vm1676, %v1675, 0
        %v1678 = vshrl.u32 %v1677, 5
        %v1679 = vand.u32 %v1677, 31
        %v1680 = vsub.s32 32, %v1679
        %v1681 = vshrl.u32 683565275, %v1680
        %v1682 = vshll.u32 683565275, %v1679
        %v1683 = vshrl.u32 2475754826, %v1680
        %v1684 = vor.u32 %v1682, %v1683
        %v1685 = vshll.u32 2475754826, %v1679
        %v1686 = vshrl.u32 2131351028, %v1680
        %v1687 = vor.u32 %v1685, %v1686
        %v1688 = vshll.u32 2131351028, %v1679
        %v1689 = vshrl.u32 2102212464, %v1680
        %v1690 = vor.u32 %v1688, %v1689
        %v1691 = vshll.u32 2102212464, %v1679
        %v1692 = vshrl.u32 920167782, %v1680
        %v1693 = vor.u32 %v1691, %v1692
        %v1694 = vshll.u32 920167782, %v1679
        %v1695 = vshrl.u32 1326507024, %v1680
        %v1696 = vor.u32 %v1694, %v1695
        %vm1697 = vcmp.lt.s32.totalorder %v1678, 1
        %vm1698 = vcmp.lt.s32.totalorder %v1678, 2
        %vm1699 = vcmp.lt.s32.totalorder %v1678, 3
        %vm1700 = vcmp.lt.s32.totalorder %v1678, 4
        %v1701 = vsel %vm1697, %v1681, %v1684
        %v1702 = vsel %vm1700, %v1690, 2102212464
        %v1703 = vsel %vm1699, %v1687, %v1702
        %v1704 = vsel %vm1698, %v1701, %v1703
        %v1705 = vsel %vm1697, %v1684, %v1687
        %v1706 = vsel %vm1700, %v1693, 920167782
        %v1707 = vsel %vm1699, %v1690, %v1706
        %v1708 = vsel %vm1698, %v1705, %v1707
        %v1709 = vsel %vm1697, %v1687, %v1690
        %v1710 = vsel %vm1700, %v1696, 1326507024
        %v1711 = vsel %vm1699, %v1693, %v1710
        %v1712 = vsel %vm1698, %v1709, %v1711
        %v1713 = vshll.u32 %v1673, 8
        %v1714 = vmul.u32.u64.compose %v1713, %v1712
        %v1715 = vextract.low.u32 %v1714
        %v1716 = vextract.high.u32 %v1714
        %v1717 = vmul.u32.u64.compose %v1713, %v1708
        %v1718 = vextract.low.u32 %v1717
        %v1719 = vextract.high.u32 %v1717
        %v1720 = vmul.u32 %v1713, %v1704
        %v1721 = vadd.s32 %v1716, %v1718
        %vm1722 = vc.u32 %v1716, %v1718
        %v1723 = vadd.s32 %v1719, 1
        %v1724 = vsel %vm1722, %v1723, %v1719
        %v1725 = vadd.s32 %v1720, %v1724
        %v1726 = vadd.s32 %v1725, 536870912
        %v1727 = vshrl.u32 %v1726, 30
        %v1728 = vshll.u32 %v1727, 30
        %v1729 = vsub.s32 %v1725, %v1728
        %vm1730 = vcmp.lt.s32.totalorder %v1729, 0
        %v1731 = vsub.s32 0, %v1729
        %v1732 = vsel %vm1730, %v1731, %v1729
        %v1733 = vclz %v1732
        %v1734 = vsub.s32 %v1733, 2
        %vm1735 = vcmp.gt.s32.totalorder 0, %v1734
        %v1736 = vsel %vm1735, 0, %v1734
        %v1737 = vsub.s32 32, %v1736
        %v1738 = vshll.u32 %v1729, %v1736
        %v1739 = vshrl.u32 %v1721, %v1737
        %v1740 = vor.u32 %v1738, %v1739
        %v1741 = vsub.s32 4294967266, %v1736
        %v1742 = vadd.s32 %v1741, 127
        %v1743 = vshll.u32 %v1742, 23
        %v1744 = vor.u32 4788187, %v1743
        %v1745 = vand.u32 2147483647, %v1744
        %v1747 = vcvt.s32.f32 %v1740
        %v1748 = vmul.f32 %v1747, %v1745
        %v1749 = vxor.u32 %v1748, 2147483648
        %v1750 = vsel %vm1667, %v1749, %v1748
        %v1751 = vsub.s32 4, %v1727
        %v1752 = vsel %vm1667, %v1751, %v1727
        %v1753 = vsel %vm1666, %v414, %v1750
        %v1754 = vsel %vm1666, 0, %v1752
        %v1755 = vcosq.f32.pop %v1753
        %v1756 = vsinq.f32.pop %v1753
        %vm1757 = vweird.f32 %v414
        %v1758 = vadd.s32 %v1754, 3
        %v1759 = vand.u32 %v1758, 3
        %vm1760 = vcmp.lt.s32.totalorder %v1759, 2
        %vm1761 = vcmp.eq.s32.totalorder %v1759, 0
        %v1762 = vxor.u32 %v1756, 2147483648
        %v1763 = vsel %vm1761, %v1755, %v1762
        %vm1764 = vcmp.eq.s32.totalorder %v1759, 2
        %v1765 = vxor.u32 %v1755, 2147483648
        %v1766 = vsel %vm1764, %v1765, %v1756
        %v1767 = vsel %vm1760, %v1763, %v1766
        %v1768 = vsel %vm1757, nan, %v1767
        %v1769 = vld [vmem:[%s3] sm:$0xff]
        %v1770 = vld [vmem:[%s3 + $0x8] sm:$0xff]
        %v1771 = vld [vmem:[%s3 + $0x10] sm:$0xff]
        %v1772 = vld [vmem:[%s3 + $0x18] sm:$0xff]
        %v1773 = vld [vmem:[%s3 + $0x20] sm:$0xff]
        %v1774 = vld [vmem:[%s3 + $0x28] sm:$0xff]
        %v1775 = vld [vmem:[%s3 + $0x30] sm:$0xff]
        %v1776 = vld [vmem:[%s3 + $0x38] sm:$0xff]
        %v1777 = vld [vmem:[%s3 + $0x40] sm:$0xff]
        %v1778 = vld [vmem:[%s3 + $0x48] sm:$0xff]
        %v1779 = vld [vmem:[%s3 + $0x50] sm:$0xff]
        %v1780 = vld [vmem:[%s3 + $0x58] sm:$0xff]
        %v1781 = vld [vmem:[%s3 + $0x60] sm:$0xff]
        %v1782 = vld [vmem:[%s3 + $0x68] sm:$0xff]
        %v1783 = vld [vmem:[%s3 + $0x70] sm:$0xff]
        %v1784 = vld [vmem:[%s3 + $0x78] sm:$0xff]
        %v1785 = vld [vmem:[%s4] sm:$0x1]
        %v1787 = vlaneseq
        %v1788 = vshrl.u32 %v1787, 7
        %v1789 = vsub.s32 0, %v1788
        %v1790 = vrot.slane %v1785, %v1789
        %1792 = vmatprep.subr.mxu0 0.0
        %1793 = vmatpush1.msra.mxu0 %v1769
        %1794 = vmatprep.subr.mxu0 0.0
        %1795 = vmatpush1.msra.mxu0 %v1770
        %1796 = vmatprep.subr.mxu0 0.0
        %1797 = vmatpush1.msra.mxu0 %v1771
        %1798 = vmatprep.subr.mxu0 0.0
        %1799 = vmatpush1.msra.mxu0 %v1772
        %1800 = vmatprep.subr.mxu0 0.0
        %1801 = vmatpush1.msra.mxu0 %v1773
        %1802 = vmatprep.subr.mxu0 0.0
        %1803 = vmatpush1.msra.mxu0 %v1774
        %1804 = vmatprep.subr.mxu0 0.0
        %1805 = vmatpush1.msra.mxu0 %v1775
        %1806 = vmatprep.subr.mxu0 0.0
        %1807 = vmatpush1.msra.mxu0 %v1776
        %1808 = vmatprep.subr.mxu0 0.0
        %1809 = vmatpush1.msra.mxu0 %v1777
        %1810 = vmatprep.subr.mxu0 0.0
        %1811 = vmatpush1.msra.mxu0 %v1778
        %1812 = vmatprep.subr.mxu0 0.0
        %1813 = vmatpush1.msra.mxu0 %v1779
        %1814 = vmatprep.subr.mxu0 0.0
        %1815 = vmatpush1.msra.mxu0 %v1780
        %1816 = vmatprep.subr.mxu0 0.0
        %1817 = vmatpush1.msra.mxu0 %v1781
        %1818 = vmatprep.subr.mxu0 0.0
        %1819 = vmatpush1.msra.mxu0 %v1782
        %1820 = vmatprep.subr.mxu0 0.0
        %1821 = vmatpush1.msra.mxu0 %v1783
        %1822 = vmatprep.subr.mxu0 0.0
        %1823 = vmatpush1.msra.mxu0 %v1784
        %1824 = vmatprep.subr.mxu0 0.0
        %1825 = vmatpush1.msra.mxu0 0.0
        %1826 = vmatprep.subr.mxu0 0.0
        %1827 = vmatpush1.msra.mxu0 0.0
        %1828 = vmatprep.subr.mxu0 0.0
        %1829 = vmatpush1.msra.mxu0 0.0
        %1830 = vmatprep.subr.mxu0 0.0
        %1831 = vmatpush1.msra.mxu0 0.0
        %1832 = vmatprep.subr.mxu0 0.0
        %1833 = vmatpush1.msra.mxu0 0.0
        %1834 = vmatprep.subr.mxu0 0.0
        %1835 = vmatpush1.msra.mxu0 0.0
        %1836 = vmatprep.subr.mxu0 0.0
        %1837 = vmatpush1.msra.mxu0 0.0
        %1838 = vmatprep.subr.mxu0 0.0
        %1839 = vmatpush1.msra.mxu0 0.0
        %1840 = vmatprep.subr.mxu0 0.0
        %1841 = vmatpush1.msra.mxu0 0.0
        %1842 = vmatprep.subr.mxu0 0.0
        %1843 = vmatpush1.msra.mxu0 0.0
        %1844 = vmatprep.subr.mxu0 0.0
        %1845 = vmatpush1.msra.mxu0 0.0
        %1846 = vmatprep.subr.mxu0 0.0
        %1847 = vmatpush1.msra.mxu0 0.0
        %1848 = vmatprep.subr.mxu0 0.0
        %1849 = vmatpush1.msra.mxu0 0.0
        %1850 = vmatprep.subr.mxu0 0.0
        %1851 = vmatpush1.msra.mxu0 0.0
        %1852 = vmatprep.subr.mxu0 0.0
        %1853 = vmatpush1.msra.mxu0 0.0
        %1854 = vmatprep.subr.mxu0 0.0
        %1855 = vmatpush1.msra.mxu0 0.0
        %1856 = vmatprep.mubr.f32.mxu0 0.0
        %1857 = vmatmul.mubr.f32.gmra.mrb[0].mxu0 %v520
        %v1858 = vpop.f32.mrb[0].mxu0
        %v1859 = vadd.f32 %v1790, %v1858
        %v1860 = vpop.f32.mrb[0].mxu0
        %1861 = vmatprep.mubr.f32.mxu0 0.0
        %1862 = vmatmul.mubr.f32.gmra.mrb[0].mxu0 %v624
        %v1863 = vpop.f32.mrb[0].mxu0
        %v1864 = vadd.f32 %v1790, %v1863
        %v1865 = vpop.f32.mrb[0].mxu0
        %1866 = vmatprep.mubr.f32.mxu0 0.0
        %1867 = vmatmul.mubr.f32.gmra.mrb[0].mxu0 %v728
        %v1868 = vpop.f32.mrb[0].mxu0
        %v1869 = vadd.f32 %v1790, %v1868
        %v1870 = vpop.f32.mrb[0].mxu0
        %1871 = vmatprep.mubr.f32.mxu0 0.0
        %1872 = vmatmul.mubr.f32.gmra.mrb[0].mxu0 %v832
        %v1873 = vpop.f32.mrb[0].mxu0
        %v1874 = vadd.f32 %v1790, %v1873
        %v1875 = vpop.f32.mrb[0].mxu0
        %1876 = vmatprep.mubr.f32.mxu0 0.0
        %1877 = vmatmul.mubr.f32.gmra.mrb[0].mxu0 %v936
        %v1878 = vpop.f32.mrb[0].mxu0
        %v1879 = vadd.f32 %v1790, %v1878
        %v1880 = vpop.f32.mrb[0].mxu0
        %1881 = vmatprep.mubr.f32.mxu0 0.0
        %1882 = vmatmul.mubr.f32.gmra.mrb[0].mxu0 %v1040
        %v1883 = vpop.f32.mrb[0].mxu0
        %v1884 = vadd.f32 %v1790, %v1883
        %v1885 = vpop.f32.mrb[0].mxu0
        %1886 = vmatprep.mubr.f32.mxu0 0.0
        %1887 = vmatmul.mubr.f32.gmra.mrb[0].mxu0 %v1144
        %v1888 = vpop.f32.mrb[0].mxu0
        %v1889 = vadd.f32 %v1790, %v1888
        %v1890 = vpop.f32.mrb[0].mxu0
        %1891 = vmatprep.mubr.f32.mxu0 0.0
        %1892 = vmatmul.mubr.f32.gmra.mrb[0].mxu0 %v1248
        %v1893 = vpop.f32.mrb[0].mxu0
        %v1894 = vadd.f32 %v1790, %v1893
        %v1895 = vpop.f32.mrb[0].mxu0
        %1896 = vmatprep.mubr.f32.mxu0 0.0
        %1897 = vmatmul.mubr.f32.gmra.mrb[0].mxu0 %v1352
        %v1898 = vpop.f32.mrb[0].mxu0
        %v1899 = vadd.f32 %v1790, %v1898
        %v1900 = vpop.f32.mrb[0].mxu0
        %1901 = vmatprep.mubr.f32.mxu0 0.0
        %1902 = vmatmul.mubr.f32.gmra.mrb[0].mxu0 %v1456
        %v1903 = vpop.f32.mrb[0].mxu0
        %v1904 = vadd.f32 %v1790, %v1903
        %v1905 = vpop.f32.mrb[0].mxu0
        %1906 = vmatprep.mubr.f32.mxu0 0.0
        %1907 = vmatmul.mubr.f32.gmra.mrb[0].mxu0 %v1560
        %v1908 = vpop.f32.mrb[0].mxu0
        %v1909 = vadd.f32 %v1790, %v1908
        %v1910 = vpop.f32.mrb[0].mxu0
        %1911 = vmatprep.mubr.f32.mxu0 0.0
        %1912 = vmatmul.mubr.f32.gmra.mrb[0].mxu0 %v1664
        %v1913 = vpop.f32.mrb[0].mxu0
        %v1914 = vadd.f32 %v1790, %v1913
        %v1915 = vpop.f32.mrb[0].mxu0
        %1916 = vmatprep.mubr.f32.mxu0 0.0
        %1917 = vmatmul.mubr.f32.gmra.mrb[0].mxu0 %v1768
        %v1918 = vpop.f32.mrb[0].mxu0
        %v1919 = vadd.f32 %v1790, %v1918
        %v1920 = vpop.f32.mrb[0].mxu0
        %1921 = vdwg.mxu0
        %1922 = vst [vmem:[%s218] sm:$0xff] %v1859
        %1923 = vst [vmem:[%s218 + $0x8] sm:$0xff] %v1864
        %1924 = vst [vmem:[%s218 + $0x10] sm:$0xff] %v1869
        %1925 = vst [vmem:[%s218 + $0x18] sm:$0xff] %v1874
        %1926 = vst [vmem:[%s218 + $0x20] sm:$0xff] %v1879
        %1927 = vst [vmem:[%s218 + $0x28] sm:$0xff] %v1884
        %1928 = vst [vmem:[%s218 + $0x30] sm:$0xff] %v1889
        %1929 = vst [vmem:[%s218 + $0x38] sm:$0xff] %v1894
        %1930 = vst [vmem:[%s218 + $0x40] sm:$0xff] %v1899
        %1931 = vst [vmem:[%s218 + $0x48] sm:$0xff] %v1904
        %1932 = vst [vmem:[%s218 + $0x50] sm:$0xff] %v1909
        %1933 = vst [vmem:[%s218 + $0x58] sm:$0xff] %v1914
        %1934 = vst [vmem:[%s218 + $0x60] sm:$0xff] %v1919
        %s1935 = sand.u32 %s137, 1
        %s1936 = scalar_lea.sflag [#allocation3], %s1935
        %s1937 = sand.u32 %s137, 1
        %s1938 = smul.addr %s1937, 104
        %s1939 = scalar_lea.vmem [#allocation2], %s1938
        // Predicated region
        $region41: #{tpu_custom_call.1} parent=39 // pred_check
          %p1940 = pneg %p147
        $region42: #{tpu_custom_call.1} parent=39 // pred_check_branch
          %1942 = sbr.rel (%p1940) target = $region44
        $region43: #{tpu_custom_call.1} parent=39 // pred_region
          %s1943 = smul.u32 13, %s19
          %s1945 = ssub.s32 1664, 1664
          %1946 = vsyncadd %s1936, %s1945
          %s1947 = smul.addr %s1943, 128
          %s1948 = scalar_lea.hbm %s5, %s1947
          %s1949 = sshll.u32 %s1939, 4
          %s1950 = int_to_ptr.vmem [resolvable:$true] %s1949
          %1955 = dma.vmem_to_hbm [thread:$0]  %s1950, 1664, %s1948, %s1936, 128, 128, 8
        $region44: #{tpu_custom_call.1} parent=39 // pred_fallthru
          _
      $region40: #{tpu_custom_call.1} parent=5 // pred_fallthru
        _
      %p1956 = scmp.le.s32.totalorder 2, %s14
      // Predicated region
      $region45: #{tpu_custom_call.1} parent=5 // pred_check
        %p1957 = pneg %p1956
      $region46: #{tpu_custom_call.1} parent=5 // pred_check_branch
        %1959 = sbr.rel (%p1957) target = $region48
      $region47: #{tpu_custom_call.1} parent=5 // pred_region
        %s1960 = ssub.s32 %s14, 2
        // Predicated region
        $region49: #{tpu_custom_call.1} parent=47 // pred_check
          %p1961 = pneg %p153
        $region50: #{tpu_custom_call.1} parent=47 // pred_check_branch
          %1963 = sbr.rel (%p1961) target = $region52
        $region51: #{tpu_custom_call.1} parent=47 // pred_region
          %s1964 = sand.u32 %s138, 1
          %s1965 = scalar_lea.sflag [#allocation3], %s1964
          %s1966 = sand.u32 %s138, 1
          %s1967 = smul.addr %s1966, 104
          %s1968 = scalar_lea.vmem [#allocation2], %s1967
          %1969 = dma.done %s1965, 1664
        $region52: #{tpu_custom_call.1} parent=47 // pred_fallthru
          _
      $region48: #{tpu_custom_call.1} parent=5 // pred_fallthru
        _
    $region6: #{tpu_custom_call.1} parent=1 // loop_footer
      %s18 = sadd.s32 1, %s14
    $region7: #{tpu_custom_call.1} parent=1 // loop_footer_branch
      %13 = sbr.rel target = $region3
    $region8: #{tpu_custom_call.1} parent=1 // loop_exit
      _
    %1970 = vsyncpa [#allocation3], 1
    %s1971 = scalar_lea.sflag [#allocation3], 1
    %1972 = vsyncpa %s1971, 1

</llo_original>
